<compile_context>
chip_gen: v7x
topology: tpu7x:2x2x1
jax: 0.10.0
libtpu: 0.0.40
codegen_flags: <defaults>
</compile_context>

<pallas_src>
import jax
import jax.numpy as jnp
from jax.experimental import pallas as pl
from jax.experimental.pallas import tpu as pltpu

# ---------------- model hyper-parameters (small, module-consistent) ---------
B = 2        # batch size (point clouds)
N = 64       # points per cloud
D = 3        # point dimensionality (the module fixes n_dims=3)
P = 128      # NUM_BPS_POINTS
H = 256      # hsize (hard-coded to 256 in the module)
E = 64       # embed
EPAD = 128   # head padded to a full 128-lane group
KAUG = 8     # augmented contraction dim for the BPS distance matmul
EPS = 1e-5   # BatchNorm eps (PyTorch default)

# ------------- rows of the packed (N_VEC_ROWS, VEC_W) parameter slab --------
VEC_W = 256
(R_B1, R_B2, R_B3, R_B4, R_B5, R_S5, R_T5) = range(7)
N_VEC_ROWS = 7


# ------------------------------ Pallas kernel --------------------------------
def bps_densenet_kernel(
    pts_aug_ref,    # (B*N, 8)   bf16   [x, y, z, 1, 0...]
    xnorm_ref,      # (B*N, 1)   f32    |p|^2 (kept f32 for precision)
    basis_aug_ref,  # (8, P)     bf16   [-2 b^T ; |b|^2 ; 0...]
    wx_ref,         # (P, 640)   bf16   [W1 | W3a | W5a(pad->128)]  (bn0 folded in)
    vec_ref,        # (7, 256)   f32    folded biases + bn5 scale/shift
    w2_hbm,         # (H, H)     bf16   HBM (pl.ANY)  bn1 folded in
    wu2_hbm,        # (H, 384)   bf16   HBM (pl.ANY)  [W3b | W5b(pad)], bn2 folded
    w4_hbm,         # (H, H)     bf16   HBM (pl.ANY)  bn3 folded in
    w5c_hbm,        # (H, 128)   bf16   HBM (pl.ANY)  bn4 folded in, padded
    out_ref,        # (B, 128)   f32
    w2_v, wu2_v, w4_v, w5c_v,    # VMEM scratch for the late-stage weights
    dma_sems,                    # SemaphoreType.DMA((4,))
):
    f32 = jnp.float32
    bf16 = jnp.bfloat16

    # Kick off the late-stage weight fetches immediately; they overlap with
    # the BPS distance matmul and the first dense matmuls (biggest win on
    # v5e/v6e HBM bandwidth; harmless on v7x).
    cp_w2 = pltpu.make_async_copy(w2_hbm, w2_v, dma_sems.at[0])
    cp_wu2 = pltpu.make_async_copy(wu2_hbm, wu2_v, dma_sems.at[1])
    cp_w4 = pltpu.make_async_copy(w4_hbm, w4_v, dma_sems.at[2])
    cp_w5c = pltpu.make_async_copy(w5c_hbm, w5c_v, dma_sems.at[3])
    cp_w2.start(); cp_wu2.start(); cp_w4.start(); cp_w5c.start()

    def vec(row, width=VEC_W):                     # (1, width) static slice
        return vec_ref[row:row + 1, 0:width]

    def mm(a, w):                                  # bf16 operands, f32 accumulate
        return jnp.dot(a.astype(bf16), w, preferred_element_type=f32)

    # ---- BPS encoding: one augmented matmul ---------------------------------
    # dist[i,j] = |p_i|^2 + |b_j|^2 - 2 p_i.b_j ; the |b|^2 and -2b terms live
    # inside basis_aug; |p|^2 is added as an f32 rank-1 term.
    dist = jnp.dot(pts_aug_ref[...], basis_aug_ref[...],
                   preferred_element_type=f32) + xnorm_ref[...]     # (B*N, P)
    dist = jnp.maximum(dist, 0.0)
    mins = [jnp.min(dist[b * N:(b + 1) * N, :], axis=0, keepdims=True)
            for b in range(B)]                                      # B x (1, P)
    x = jnp.sqrt(jnp.concatenate(mins, axis=0))                     # (B, P)

    # ---- dense net (BN0..BN4 pre-folded into weights/biases) ----------------
    xp = mm(x, wx_ref[...])                       # (B, 640): x @ [W1|W3a|W5a]
    u1 = jnp.maximum(xp[:, 0:H] + vec(R_B1), 0.0)

    cp_w2.wait()
    u2 = jnp.maximum(mm(u1, w2_v[...]) + vec(R_B2), 0.0)

    cp_wu2.wait()
    u2p = mm(u2, wu2_v[...])                      # (B, 384): u2 @ [W3b|W5b]
    u3 = jnp.maximum(xp[:, H:2 * H] + u2p[:, 0:H] + vec(R_B3), 0.0)

    cp_w4.wait()
    u4 = jnp.maximum(mm(u3, w4_v[...]) + vec(R_B4), 0.0)

    cp_w5c.wait()
    y = jnp.maximum(xp[:, 2 * H:2 * H + EPAD] + u2p[:, H:H + EPAD]
                    + mm(u4, w5c_v[...]) + vec(R_B5, EPAD), 0.0)

    # bn5 is the only BN left in-kernel (cannot fold through the final relu).
    out_ref[...] = y * vec(R_S5, EPAD) + vec(R_T5, EPAD)


# --------------------------------- helpers -----------------------------------
def _round_bf16(x):
    """Round to bf16-representable f32 (keeps coordinate casts exact)."""
    return x.astype(jnp.bfloat16).astype(jnp.float32)


def fold_bn(bn_params):
    """Eval-mode BN: (x - rm)/sqrt(rv+eps)*g + b  ==  x*scale + shift."""
    gamma, beta, rmean, rvar = bn_params
    scale = gamma * jax.lax.rsqrt(rvar + EPS)
    shift = beta - rmean * scale
    return scale, shift                           # each (1, C)


def _pad_row(v, width=VEC_W):
    v = v.reshape(1, -1).astype(jnp.float32)
    return jnp.pad(v, ((0, 0), (0, width - v.shape[1])))


def _pad_cols(m, width):
    return jnp.pad(m.astype(jnp.float32), ((0, 0), (0, width - m.shape[1])))


def prepare_bps_inputs(pts_cf, basis):
    """Augmented point / basis operands for the single BPS distance matmul."""
    f32 = jnp.float32
    pts = jnp.transpose(pts_cf, (0, 2, 1)).reshape(-1, D).astype(f32)  # (B*N, 3)
    xnorm = jnp.sum(pts * pts, axis=1, keepdims=True)                  # (B*N, 1) f32
    ones = jnp.ones((pts.shape[0], 1), f32)
    zpts = jnp.zeros((pts.shape[0], KAUG - 4), f32)
    pts_aug = jnp.concatenate([pts, ones, zpts], axis=1)               # (B*N, 8)

    bnorm = jnp.sum(basis.astype(f32) ** 2, axis=1, keepdims=True)     # (P, 1)
    zb = jnp.zeros((P, KAUG - 4), f32)
    basis_aug = jnp.concatenate([-2.0 * basis.astype(f32), bnorm, zb],
                                axis=1).T                              # (8, P)
    return pts_aug.astype(jnp.bfloat16), xnorm, basis_aug.astype(jnp.bfloat16)


def prepare_kernel_params(p):
    """Fold eval-mode BN0..BN4 into the following layer's weights/biases and
    pack everything into the kernel's slabs (all precomputed host-side)."""
    bf = jnp.bfloat16
    s0, t0 = fold_bn(p['bn0'])
    s1, t1 = fold_bn(p['bn1'])
    s2, t2 = fold_bn(p['bn2'])
    s3, t3 = fold_bn(p['bn3'])
    s4, t4 = fold_bn(p['bn4'])
    s5, t5 = fold_bn(p['bn5'])

    w3a, w3b = p['w3'][:P], p['w3'][P:]
    w5a, w5b, w5c = p['w5'][:P], p['w5'][P:P + H], p['w5'][P + H:]

    # scale folded into weight rows (input-feature scaling), shift into bias
    W1 = p['w1'] * s0.reshape(-1, 1)
    W3a = w3a * s0.reshape(-1, 1)
    W5a = w5a * s0.reshape(-1, 1)
    W2 = p['w2'] * s1.reshape(-1, 1)
    W3b = w3b * s2.reshape(-1, 1)
    W5b = w5b * s2.reshape(-1, 1)
    W4 = p['w4'] * s3.reshape(-1, 1)
    W5c = w5c * s4.reshape(-1, 1)

    B1 = t0 @ p['w1'] + p['b1']
    B2 = t1 @ p['w2'] + p['b2']
    B3 = t0 @ w3a + t2 @ w3b + p['b3']
    B4 = t3 @ p['w4'] + p['b4']
    B5 = t0 @ w5a + t2 @ w5b + t4 @ w5c + p['b5']

    wx = jnp.concatenate([W1, W3a, _pad_cols(W5a, EPAD)], axis=1).astype(bf)   # (P, 640)
    wu2 = jnp.concatenate([W3b, _pad_cols(W5b, EPAD)], axis=1).astype(bf)      # (H, 384)
    w2 = W2.astype(bf)                                                         # (H, H)
    w4 = W4.astype(bf)                                                         # (H, H)
    w5c_p = _pad_cols(W5c, EPAD).astype(bf)                                    # (H, 128)

    rows = [B1, B2, B3, B4, B5, s5, t5]
    vec_slab = jnp.concatenate([_pad_row(r) for r in rows], axis=0)            # (7, 256)
    return wx, w2, wu2, w4, w5c_p, vec_slab


# ------------------------------ wrapper ---------------------------------------
def bps_densenet_forward(pts_cf, basis, p):
    """pts_cf: (B, 3, N) channels-first, basis: (P, 3), p: param dict."""
    pts_aug, xnorm, basis_aug = prepare_bps_inputs(pts_cf, basis)
    wx, w2, wu2, w4, w5c, vec_slab = prepare_kernel_params(p)

    args = (pts_aug, xnorm, basis_aug, wx, vec_slab, w2, wu2, w4, w5c)

    flops = 2 * (B * N * KAUG * P
                 + B * (P * (2 * H + EPAD) + H * H + H * (H + EPAD)
                        + H * H + H * EPAD))
    bytes_accessed = (sum(int(a.size) * a.dtype.itemsize for a in args)
                      + B * EPAD * 4)

    vmem = pl.BlockSpec(memory_space=pltpu.MemorySpace.VMEM)
    hbm = pl.BlockSpec(memory_space=pl.ANY)   # late weights: manual DMA overlap

    out = pl.pallas_call(
        bps_densenet_kernel,
        out_shape=jax.ShapeDtypeStruct((B, EPAD), jnp.float32),
        in_specs=[vmem, vmem, vmem, vmem, vmem, hbm, hbm, hbm, hbm],
        out_specs=vmem,
        scratch_shapes=[
            pltpu.VMEM((H, H), jnp.bfloat16),          # w2
            pltpu.VMEM((H, H + EPAD), jnp.bfloat16),   # [w3b | w5b]
            pltpu.VMEM((H, H), jnp.bfloat16),          # w4
            pltpu.VMEM((H, EPAD), jnp.bfloat16),       # w5c (padded)
            pltpu.SemaphoreType.DMA((4,)),
        ],
        cost_estimate=pl.CostEstimate(flops=flops,
                                      transcendentals=B * P,
                                      bytes_accessed=bytes_accessed),
    )(*args)
    return out[:, :E]                                  # drop head padding


# --------------------------- parameter init -----------------------------------
def _linear_init(key, fin, fout):
    kw, kb = jax.random.split(key)
    w = jax.random.normal(kw, (fin, fout), jnp.float32) / jnp.sqrt(float(fin))
    b = 0.01 * jax.random.normal(kb, (1, fout), jnp.float32)
    return w, b


def _bn_init(key, c):
    kg, kb, km, kv = jax.random.split(key, 4)
    gamma = 1.0 + 0.1 * jax.random.normal(kg, (1, c), jnp.float32)
    beta = 0.1 * jax.random.normal(kb, (1, c), jnp.float32)
    rmean = 0.1 * jax.random.normal(km, (1, c), jnp.float32)
    rvar = jax.random.uniform(kv, (1, c), jnp.float32, minval=0.5, maxval=1.5)
    return (gamma, beta, rmean, rvar)


def init_params(key):
    ks = jax.random.split(key, 11)
    p = {}
    p['bn0'] = _bn_init(ks[0], P)
    p['w1'], p['b1'] = _linear_init(ks[1], P, H);          p['bn1'] = _bn_init(ks[2], H)
    p['w2'], p['b2'] = _linear_init(ks[3], H, H);          p['bn2'] = _bn_init(ks[4], H)
    p['w3'], p['b3'] = _linear_init(ks[5], P + H, H);      p['bn3'] = _bn_init(ks[6], H)
    p['w4'], p['b4'] = _linear_init(ks[7], H, H);          p['bn4'] = _bn_init(ks[8], H)
    p['w5'], p['b5'] = _linear_init(ks[9], P + 2 * H, E);  p['bn5'] = _bn_init(ks[10], E)
    return p


def make_basis(key):
    """Deterministic stand-in for bps.generate_random_basis: points in unit ball."""
    kd, kr = jax.random.split(key)
    d = jax.random.normal(kd, (P, D), jnp.float32)
    d = d / jnp.linalg.norm(d, axis=1, keepdims=True)
    r = jax.random.uniform(kr, (P, 1), jnp.float32) ** (1.0 / 3.0)
    return d * r


# --------------------------- pure-JAX reference --------------------------------
def reference_forward(pts_cf, basis, p):
    """Straightforward layer-by-layer eval-mode forward.

    Uses the same bf16 operand quantization (weights folded with the BN scale
    before the bf16 cast) and the same augmented-distance construction as the
    kernel so products are bit-identical; structure (separate matmuls, no slab
    merging / padding / manual DMA) is the plain module wiring, which checks
    the kernel's packing, slicing and skip connections independently.
    """
    bf, f32 = jnp.bfloat16, jnp.float32
    relu = jax.nn.relu

    def mm(a, w):
        return jnp.dot(a.astype(bf), w.astype(bf), preferred_element_type=f32)

    # BPS encoding
    pts_aug, xnorm, basis_aug = prepare_bps_inputs(pts_cf, basis)
    dist = jnp.dot(pts_aug, basis_aug, preferred_element_type=f32) + xnorm
    dist = jnp.clip(dist, 0.0, None).reshape(B, N, P)
    x = jnp.sqrt(jnp.min(dist, axis=1))                                # (B, P)

    s0, t0 = fold_bn(p['bn0']); s1, t1 = fold_bn(p['bn1'])
    s2, t2 = fold_bn(p['bn2']); s3, t3 = fold_bn(p['bn3'])
    s4, t4 = fold_bn(p['bn4']); s5, t5 = fold_bn(p['bn5'])
    w3a, w3b = p['w3'][:P], p['w3'][P:]
    w5a, w5b, w5c = p['w5'][:P], p['w5'][P:P + H], p['w5'][P + H:]

    u1 = relu(mm(x, s0.T * p['w1']) + (t0 @ p['w1'] + p['b1']))
    u2 = relu(mm(u1, s1.T * p['w2']) + (t1 @ p['w2'] + p['b2']))
    u3 = relu(mm(x, s0.T * w3a) + mm(u2, s2.T * w3b)
              + (t0 @ w3a + t2 @ w3b + p['b3']))
    u4 = relu(mm(u3, s3.T * p['w4']) + (t3 @ p['w4'] + p['b4']))
    y = relu(mm(x, s0.T * w5a) + mm(u2, s2.T * w5b) + mm(u4, s4.T * w5c)
             + (t0 @ w5a + t2 @ w5b + t4 @ w5c + p['b5']))
    return y * s5 + t5                                                 # (B, E)


# ----------------------------------- main ---------------------------------------
if __name__ == "__main__":
    key = jax.random.PRNGKey(0)
    k_pts, k_basis, k_par = jax.random.split(key, 3)

    pts_cf = _round_bf16(0.5 * jax.random.normal(k_pts, (B, D, N), jnp.float32))
    basis = _round_bf16(make_basis(k_basis))                           # (P, 3)
    params = init_params(k_par)

    out = jax.block_until_ready(bps_densenet_forward(pts_cf, basis, params))
    ref = reference_forward(pts_cf, basis, params)

    assert out.shape == (B, E), out.shape
    max_err = float(jnp.max(jnp.abs(out - ref)))
    assert jnp.allclose(out, ref, rtol=2e-3, atol=2e-3), max_err

    print("KERNEL_OK")
</pallas_src>

<mosaic_0001>
module attributes {stable_mosaic.version = 11 : i64} {
  func.func @bps_densenet_kernel(%arg0: memref<128x8xbf16, #tpu.memory_space<vmem>>, %arg1: memref<128x1xf32, #tpu.memory_space<vmem>>, %arg2: memref<8x128xbf16, #tpu.memory_space<vmem>>, %arg3: memref<128x640xbf16, #tpu.memory_space<vmem>>, %arg4: memref<7x256xf32, #tpu.memory_space<vmem>>, %arg5: memref<256x256xbf16, #tpu.memory_space<any>>, %arg6: memref<256x384xbf16, #tpu.memory_space<any>>, %arg7: memref<256x256xbf16, #tpu.memory_space<any>>, %arg8: memref<256x128xbf16, #tpu.memory_space<any>>, %arg9: memref<2x128xf32, #tpu.memory_space<vmem>>, %arg10: memref<256x256xbf16, #tpu.memory_space<vmem>>, %arg11: memref<256x384xbf16, #tpu.memory_space<vmem>>, %arg12: memref<256x256xbf16, #tpu.memory_space<vmem>>, %arg13: memref<256x128xbf16, #tpu.memory_space<vmem>>, %arg14: memref<4x!tpu.dma_semaphore, #tpu.memory_space<semaphore_mem>>) attributes {dimension_semantics = [], scalar_prefetch = 0 : i64, scratch_operands = 5 : i64, tpu.core_type = #tpu.core_type<tc>} {
    %c0_i32 = arith.constant 0 : i32
    %0 = tpu.memref_slice %arg14[%c0_i32] : memref<4x!tpu.dma_semaphore, #tpu.memory_space<semaphore_mem>> -> memref<1x!tpu.dma_semaphore, #tpu.memory_space<semaphore_mem>>
    %1 = tpu.memref_squeeze %0 : memref<1x!tpu.dma_semaphore, #tpu.memory_space<semaphore_mem>> -> memref<!tpu.dma_semaphore, #tpu.memory_space<semaphore_mem>>
    tpu.enqueue_dma source(%arg5 : memref<256x256xbf16, #tpu.memory_space<any>>) target(%arg10 : memref<256x256xbf16, #tpu.memory_space<vmem>>) target_semaphore(%1 : memref<!tpu.dma_semaphore, #tpu.memory_space<semaphore_mem>>)
    %c1_i32 = arith.constant 1 : i32
    %2 = tpu.memref_slice %arg14[%c1_i32] : memref<4x!tpu.dma_semaphore, #tpu.memory_space<semaphore_mem>> -> memref<1x!tpu.dma_semaphore, #tpu.memory_space<semaphore_mem>>
    %3 = tpu.memref_squeeze %2 : memref<1x!tpu.dma_semaphore, #tpu.memory_space<semaphore_mem>> -> memref<!tpu.dma_semaphore, #tpu.memory_space<semaphore_mem>>
    tpu.enqueue_dma source(%arg6 : memref<256x384xbf16, #tpu.memory_space<any>>) target(%arg11 : memref<256x384xbf16, #tpu.memory_space<vmem>>) target_semaphore(%3 : memref<!tpu.dma_semaphore, #tpu.memory_space<semaphore_mem>>)
    %c2_i32 = arith.constant 2 : i32
    %4 = tpu.memref_slice %arg14[%c2_i32] : memref<4x!tpu.dma_semaphore, #tpu.memory_space<semaphore_mem>> -> memref<1x!tpu.dma_semaphore, #tpu.memory_space<semaphore_mem>>
    %5 = tpu.memref_squeeze %4 : memref<1x!tpu.dma_semaphore, #tpu.memory_space<semaphore_mem>> -> memref<!tpu.dma_semaphore, #tpu.memory_space<semaphore_mem>>
    tpu.enqueue_dma source(%arg7 : memref<256x256xbf16, #tpu.memory_space<any>>) target(%arg12 : memref<256x256xbf16, #tpu.memory_space<vmem>>) target_semaphore(%5 : memref<!tpu.dma_semaphore, #tpu.memory_space<semaphore_mem>>)
    %c3_i32 = arith.constant 3 : i32
    %6 = tpu.memref_slice %arg14[%c3_i32] : memref<4x!tpu.dma_semaphore, #tpu.memory_space<semaphore_mem>> -> memref<1x!tpu.dma_semaphore, #tpu.memory_space<semaphore_mem>>
    %7 = tpu.memref_squeeze %6 : memref<1x!tpu.dma_semaphore, #tpu.memory_space<semaphore_mem>> -> memref<!tpu.dma_semaphore, #tpu.memory_space<semaphore_mem>>
    tpu.enqueue_dma source(%arg8 : memref<256x128xbf16, #tpu.memory_space<any>>) target(%arg13 : memref<256x128xbf16, #tpu.memory_space<vmem>>) target_semaphore(%7 : memref<!tpu.dma_semaphore, #tpu.memory_space<semaphore_mem>>)
    %c0 = arith.constant 0 : index
    %c0_0 = arith.constant 0 : index
    %8 = vector.load %arg0[%c0, %c0_0] : memref<128x8xbf16, #tpu.memory_space<vmem>>, vector<128x8xbf16>
    %c0_1 = arith.constant 0 : index
    %c0_2 = arith.constant 0 : index
    %9 = vector.load %arg2[%c0_1, %c0_2] : memref<8x128xbf16, #tpu.memory_space<vmem>>, vector<8x128xbf16>
    %cst = arith.constant dense<0.000000e+00> : vector<128x128xf32>
    %10 = tpu.matmul %8, %9, %cst {dimension_numbers = #tpu.dot_dimension_numbers<[1], [0], [0], [1], [0, 0, 1, 1], [], []>} : vector<128x8xbf16>, vector<8x128xbf16>, vector<128x128xf32> -> vector<128x128xf32>
    %c0_3 = arith.constant 0 : index
    %c0_4 = arith.constant 0 : index
    %11 = vector.load %arg1[%c0_3, %c0_4] : memref<128x1xf32, #tpu.memory_space<vmem>>, vector<128x1xf32>
    %12 = vector.broadcast %11 : vector<128x1xf32> to vector<128x128xf32>
    %13 = arith.addf %10, %12 : vector<128x128xf32>
    %cst_5 = arith.constant 0.000000e+00 : f32
    %14 = vector.broadcast %cst_5 : f32 to vector<128x128xf32>
    %15 = arith.maximumf %13, %14 : vector<128x128xf32>
    %16 = vector.extract_strided_slice %15 {offsets = [0, 0], sizes = [64, 128], strides = [1, 1]} : vector<128x128xf32> to vector<64x128xf32>
    %cst_6 = arith.constant dense<0x7F800000> : vector<128xf32>
    %17 = vector.multi_reduction <minimumf>, %16, %cst_6 [0] : vector<64x128xf32> to vector<128xf32>
    %18 = vector.shape_cast %17 : vector<128xf32> to vector<1x128xf32>
    %19 = vector.extract_strided_slice %15 {offsets = [64, 0], sizes = [64, 128], strides = [1, 1]} : vector<128x128xf32> to vector<64x128xf32>
    %cst_7 = arith.constant dense<0x7F800000> : vector<128xf32>
    %20 = vector.multi_reduction <minimumf>, %19, %cst_7 [0] : vector<64x128xf32> to vector<128xf32>
    %21 = vector.shape_cast %20 : vector<128xf32> to vector<1x128xf32>
    %22 = tpu.concatenate %18, %21 in 0 : vector<1x128xf32>, vector<1x128xf32> -> vector<2x128xf32>
    %23 = math.sqrt %22 : vector<2x128xf32>
    %c0_8 = arith.constant 0 : index
    %c0_9 = arith.constant 0 : index
    %24 = vector.load %arg3[%c0_8, %c0_9] : memref<128x640xbf16, #tpu.memory_space<vmem>>, vector<128x640xbf16>
    %25 = arith.truncf %23 : vector<2x128xf32> to vector<2x128xbf16>
    %cst_10 = arith.constant dense<0.000000e+00> : vector<2x640xf32>
    %26 = tpu.matmul %25, %24, %cst_10 {dimension_numbers = #tpu.dot_dimension_numbers<[1], [0], [0], [1], [0, 0, 1, 1], [], []>} : vector<2x128xbf16>, vector<128x640xbf16>, vector<2x640xf32> -> vector<2x640xf32>
    %27 = vector.extract_strided_slice %26 {offsets = [0, 0], sizes = [2, 256], strides = [1, 1]} : vector<2x640xf32> to vector<2x256xf32>
    %c0_11 = arith.constant 0 : index
    %c0_12 = arith.constant 0 : index
    %28 = vector.load %arg4[%c0_11, %c0_12] : memref<7x256xf32, #tpu.memory_space<vmem>>, vector<1x256xf32>
    %29 = vector.broadcast %28 : vector<1x256xf32> to vector<2x256xf32>
    %30 = arith.addf %27, %29 : vector<2x256xf32>
    %cst_13 = arith.constant 0.000000e+00 : f32
    %31 = vector.broadcast %cst_13 : f32 to vector<2x256xf32>
    %32 = arith.maximumf %30, %31 : vector<2x256xf32>
    %c0_i32_14 = arith.constant 0 : i32
    %33 = tpu.memref_slice %arg14[%c0_i32_14] : memref<4x!tpu.dma_semaphore, #tpu.memory_space<semaphore_mem>> -> memref<1x!tpu.dma_semaphore, #tpu.memory_space<semaphore_mem>>
    %34 = tpu.memref_squeeze %33 : memref<1x!tpu.dma_semaphore, #tpu.memory_space<semaphore_mem>> -> memref<!tpu.dma_semaphore, #tpu.memory_space<semaphore_mem>>
    tpu.wait_dma2 semaphore(%34 : memref<!tpu.dma_semaphore, #tpu.memory_space<semaphore_mem>>) src(%arg5 : memref<256x256xbf16, #tpu.memory_space<any>>) dst(%arg10 : memref<256x256xbf16, #tpu.memory_space<vmem>>)
    %c0_15 = arith.constant 0 : index
    %c0_16 = arith.constant 0 : index
    %35 = vector.load %arg10[%c0_15, %c0_16] : memref<256x256xbf16, #tpu.memory_space<vmem>>, vector<256x256xbf16>
    %36 = arith.truncf %32 : vector<2x256xf32> to vector<2x256xbf16>
    %cst_17 = arith.constant dense<0.000000e+00> : vector<2x256xf32>
    %37 = tpu.matmul %36, %35, %cst_17 {dimension_numbers = #tpu.dot_dimension_numbers<[1], [0], [0], [1], [0, 0, 1, 1], [], []>} : vector<2x256xbf16>, vector<256x256xbf16>, vector<2x256xf32> -> vector<2x256xf32>
    %c1 = arith.constant 1 : index
    %c0_18 = arith.constant 0 : index
    %38 = vector.load %arg4[%c1, %c0_18] : memref<7x256xf32, #tpu.memory_space<vmem>>, vector<1x256xf32>
    %39 = vector.broadcast %38 : vector<1x256xf32> to vector<2x256xf32>
    %40 = arith.addf %37, %39 : vector<2x256xf32>
    %cst_19 = arith.constant 0.000000e+00 : f32
    %41 = vector.broadcast %cst_19 : f32 to vector<2x256xf32>
    %42 = arith.maximumf %40, %41 : vector<2x256xf32>
    %c1_i32_20 = arith.constant 1 : i32
    %43 = tpu.memref_slice %arg14[%c1_i32_20] : memref<4x!tpu.dma_semaphore, #tpu.memory_space<semaphore_mem>> -> memref<1x!tpu.dma_semaphore, #tpu.memory_space<semaphore_mem>>
    %44 = tpu.memref_squeeze %43 : memref<1x!tpu.dma_semaphore, #tpu.memory_space<semaphore_mem>> -> memref<!tpu.dma_semaphore, #tpu.memory_space<semaphore_mem>>
    tpu.wait_dma2 semaphore(%44 : memref<!tpu.dma_semaphore, #tpu.memory_space<semaphore_mem>>) src(%arg6 : memref<256x384xbf16, #tpu.memory_space<any>>) dst(%arg11 : memref<256x384xbf16, #tpu.memory_space<vmem>>)
    %c0_21 = arith.constant 0 : index
    %c0_22 = arith.constant 0 : index
    %45 = vector.load %arg11[%c0_21, %c0_22] : memref<256x384xbf16, #tpu.memory_space<vmem>>, vector<256x384xbf16>
    %46 = arith.truncf %42 : vector<2x256xf32> to vector<2x256xbf16>
    %cst_23 = arith.constant dense<0.000000e+00> : vector<2x384xf32>
    %47 = tpu.matmul %46, %45, %cst_23 {dimension_numbers = #tpu.dot_dimension_numbers<[1], [0], [0], [1], [0, 0, 1, 1], [], []>} : vector<2x256xbf16>, vector<256x384xbf16>, vector<2x384xf32> -> vector<2x384xf32>
    %48 = vector.extract_strided_slice %26 {offsets = [0, 256], sizes = [2, 256], strides = [1, 1]} : vector<2x640xf32> to vector<2x256xf32>
    %49 = vector.extract_strided_slice %47 {offsets = [0, 0], sizes = [2, 256], strides = [1, 1]} : vector<2x384xf32> to vector<2x256xf32>
    %50 = arith.addf %48, %49 : vector<2x256xf32>
    %c2 = arith.constant 2 : index
    %c0_24 = arith.constant 0 : index
    %51 = vector.load %arg4[%c2, %c0_24] : memref<7x256xf32, #tpu.memory_space<vmem>>, vector<1x256xf32>
    %52 = vector.broadcast %51 : vector<1x256xf32> to vector<2x256xf32>
    %53 = arith.addf %50, %52 : vector<2x256xf32>
    %cst_25 = arith.constant 0.000000e+00 : f32
    %54 = vector.broadcast %cst_25 : f32 to vector<2x256xf32>
    %55 = arith.maximumf %53, %54 : vector<2x256xf32>
    %c2_i32_26 = arith.constant 2 : i32
    %56 = tpu.memref_slice %arg14[%c2_i32_26] : memref<4x!tpu.dma_semaphore, #tpu.memory_space<semaphore_mem>> -> memref<1x!tpu.dma_semaphore, #tpu.memory_space<semaphore_mem>>
    %57 = tpu.memref_squeeze %56 : memref<1x!tpu.dma_semaphore, #tpu.memory_space<semaphore_mem>> -> memref<!tpu.dma_semaphore, #tpu.memory_space<semaphore_mem>>
    tpu.wait_dma2 semaphore(%57 : memref<!tpu.dma_semaphore, #tpu.memory_space<semaphore_mem>>) src(%arg7 : memref<256x256xbf16, #tpu.memory_space<any>>) dst(%arg12 : memref<256x256xbf16, #tpu.memory_space<vmem>>)
    %c0_27 = arith.constant 0 : index
    %c0_28 = arith.constant 0 : index
    %58 = vector.load %arg12[%c0_27, %c0_28] : memref<256x256xbf16, #tpu.memory_space<vmem>>, vector<256x256xbf16>
    %59 = arith.truncf %55 : vector<2x256xf32> to vector<2x256xbf16>
    %cst_29 = arith.constant dense<0.000000e+00> : vector<2x256xf32>
    %60 = tpu.matmul %59, %58, %cst_29 {dimension_numbers = #tpu.dot_dimension_numbers<[1], [0], [0], [1], [0, 0, 1, 1], [], []>} : vector<2x256xbf16>, vector<256x256xbf16>, vector<2x256xf32> -> vector<2x256xf32>
    %c3 = arith.constant 3 : index
    %c0_30 = arith.constant 0 : index
    %61 = vector.load %arg4[%c3, %c0_30] : memref<7x256xf32, #tpu.memory_space<vmem>>, vector<1x256xf32>
    %62 = vector.broadcast %61 : vector<1x256xf32> to vector<2x256xf32>
    %63 = arith.addf %60, %62 : vector<2x256xf32>
    %cst_31 = arith.constant 0.000000e+00 : f32
    %64 = vector.broadcast %cst_31 : f32 to vector<2x256xf32>
    %65 = arith.maximumf %63, %64 : vector<2x256xf32>
    %c3_i32_32 = arith.constant 3 : i32
    %66 = tpu.memref_slice %arg14[%c3_i32_32] : memref<4x!tpu.dma_semaphore, #tpu.memory_space<semaphore_mem>> -> memref<1x!tpu.dma_semaphore, #tpu.memory_space<semaphore_mem>>
    %67 = tpu.memref_squeeze %66 : memref<1x!tpu.dma_semaphore, #tpu.memory_space<semaphore_mem>> -> memref<!tpu.dma_semaphore, #tpu.memory_space<semaphore_mem>>
    tpu.wait_dma2 semaphore(%67 : memref<!tpu.dma_semaphore, #tpu.memory_space<semaphore_mem>>) src(%arg8 : memref<256x128xbf16, #tpu.memory_space<any>>) dst(%arg13 : memref<256x128xbf16, #tpu.memory_space<vmem>>)
    %68 = vector.extract_strided_slice %26 {offsets = [0, 512], sizes = [2, 128], strides = [1, 1]} : vector<2x640xf32> to vector<2x128xf32>
    %69 = vector.extract_strided_slice %47 {offsets = [0, 256], sizes = [2, 128], strides = [1, 1]} : vector<2x384xf32> to vector<2x128xf32>
    %70 = arith.addf %68, %69 : vector<2x128xf32>
    %c0_33 = arith.constant 0 : index
    %c0_34 = arith.constant 0 : index
    %71 = vector.load %arg13[%c0_33, %c0_34] : memref<256x128xbf16, #tpu.memory_space<vmem>>, vector<256x128xbf16>
    %72 = arith.truncf %65 : vector<2x256xf32> to vector<2x256xbf16>
    %cst_35 = arith.constant dense<0.000000e+00> : vector<2x128xf32>
    %73 = tpu.matmul %72, %71, %cst_35 {dimension_numbers = #tpu.dot_dimension_numbers<[1], [0], [0], [1], [0, 0, 1, 1], [], []>} : vector<2x256xbf16>, vector<256x128xbf16>, vector<2x128xf32> -> vector<2x128xf32>
    %74 = arith.addf %70, %73 : vector<2x128xf32>
    %c4 = arith.constant 4 : index
    %c0_36 = arith.constant 0 : index
    %75 = vector.load %arg4[%c4, %c0_36] : memref<7x256xf32, #tpu.memory_space<vmem>>, vector<1x128xf32>
    %76 = vector.broadcast %75 : vector<1x128xf32> to vector<2x128xf32>
    %77 = arith.addf %74, %76 : vector<2x128xf32>
    %cst_37 = arith.constant 0.000000e+00 : f32
    %78 = vector.broadcast %cst_37 : f32 to vector<2x128xf32>
    %79 = arith.maximumf %77, %78 : vector<2x128xf32>
    %c5 = arith.constant 5 : index
    %c0_38 = arith.constant 0 : index
    %80 = vector.load %arg4[%c5, %c0_38] : memref<7x256xf32, #tpu.memory_space<vmem>>, vector<1x128xf32>
    %81 = vector.broadcast %80 : vector<1x128xf32> to vector<2x128xf32>
    %82 = arith.mulf %79, %81 : vector<2x128xf32>
    %c6 = arith.constant 6 : index
    %c0_39 = arith.constant 0 : index
    %83 = vector.load %arg4[%c6, %c0_39] : memref<7x256xf32, #tpu.memory_space<vmem>>, vector<1x128xf32>
    %84 = vector.broadcast %83 : vector<1x128xf32> to vector<2x128xf32>
    %85 = arith.addf %82, %84 : vector<2x128xf32>
    %c0_40 = arith.constant 0 : index
    %c0_41 = arith.constant 0 : index
    %86 = vector.load %arg9[%c0_40, %c0_41] : memref<2x128xf32, #tpu.memory_space<vmem>>, vector<2x128xf32>
    tpu.vector_store %arg9[%c0_40, %c0_41], %85 {strides = array<i32>} : memref<2x128xf32, #tpu.memory_space<vmem>>, vector<2x128xf32>,
    return
  }
}

</mosaic_0001>

<llo_original>
// kernel: tpu_custom_call.1
$region0: #{tpu_custom_call.1}
  #allocation0 [shape = 'u32[]', space=smem, size = 0x4, offset = 0x4, fixed_abs, tag = 'smem constant byte address 0x4 - core index']
  #allocation1 [shape = 'u32[144,128]{1,0:T(1,128)}', space=vmem, size = 0x12000, scoped, tag = 'internal scratch']
  #allocation2 [shape = 'bf16[256,256]{1,0:T(16,128)(2,1)}', space=vmem, size = 0x20000, scoped, tag = 'scratch operand']
  #allocation3 [shape = 'bf16[256,384]{1,0:T(16,128)(2,1)}', space=vmem, size = 0x30000, scoped, tag = 'scratch operand']
  #allocation4 [shape = 'bf16[256,256]{1,0:T(16,128)(2,1)}', space=vmem, size = 0x20000, scoped, tag = 'scratch operand']
  #allocation5 [shape = 'bf16[256,128]{1,0:T(16,128)(2,1)}', space=vmem, size = 0x10000, scoped, tag = 'scratch operand']
  #allocation6 [shape = 's32[4]{0}', space=sflag, size = 0x10, scoped, tag = 'scratch operand']
  #allocation11 [shape = 's32[]', space=sflag, size = 0x4, offset = 0, fixed_abs, tag = 'sflag constant byte address 0x0 - dummy sync flag']
  #allocation13 [shape = 's32[]', space=sflag, size = 0x4, offset = 0, fixed_abs, tag = 'sflag constant byte address 0x0 - dummy sync flag']
  #allocation15 [shape = 's32[]', space=sflag, size = 0x4, offset = 0, fixed_abs, tag = 'sflag constant byte address 0x0 - dummy sync flag']
  #allocation17 [shape = 's32[]', space=sflag, size = 0x4, offset = 0, fixed_abs, tag = 'sflag constant byte address 0x0 - dummy sync flag']
  %s0 = inlined_call_operand.vmem [shape: bf16[128,8], index: 0, kind: input, shape index: {}]
  %s1 = inlined_call_operand.vmem [shape: f32[128,1], index: 1, kind: input, shape index: {}]
  %s2 = inlined_call_operand.vmem [shape: bf16[8,128], index: 2, kind: input, shape index: {}]
  %s3 = inlined_call_operand.hbm [shape: bf16[128,640], index: 3, kind: input, shape index: {}]
  %s4 = inlined_call_operand.vmem [shape: f32[7,256], index: 4, kind: input, shape index: {}]
  %s5 = inlined_call_operand.hbm [shape: bf16[256,256], index: 5, kind: input, shape index: {}]
  %s6 = inlined_call_operand.hbm [shape: bf16[256,384], index: 6, kind: input, shape index: {}]
  %s7 = inlined_call_operand.hbm [shape: bf16[256,256], index: 7, kind: input, shape index: {}]
  %s8 = inlined_call_operand.vmem [shape: bf16[256,128], index: 8, kind: input, shape index: {}]
  %s9 = inlined_call_operand.hbm [shape: f32[2,128], index: 9, kind: output, shape index: {}]
  %s10 = sld [smem:[#allocation0]]
  $region68: #{tpu_custom_call.1} parent=0
    _
  %s12 = ssub.s32 1, %s10
  %s13 = scalar_select 0, %s12, %s10
  $region1: #{tpu_custom_call.1} parent=0
    #allocation7 [shape = 'u8[163840]{0}', space=vmem, size = 0x28000, scoped, tag = 'input window, operand 3, single buffered']
    #allocation8 [shape = 's32[1]{0}', space=sflag, size = 0x4, scoped, tag = 'scoped memory for tpu_custom_call.1']
    #allocation9 [shape = 's32[1]{0}', space=sflag, size = 0x4, scoped, tag = 'scoped memory for tpu_custom_call.1']
    #allocation10 [shape = 'u8[1024]{0}', space=vmem, size = 0x400, scoped, tag = 'output window, operand 0, single buffered']
    #allocation12 [shape = 'u32[9]{0}', space=smem, size = 0x24, scoped, tag = 'DMA stride descriptor']
    #allocation14 [shape = 'u32[9]{0}', space=smem, size = 0x24, scoped, tag = 'DMA stride descriptor']
    #allocation16 [shape = 'u32[9]{0}', space=smem, size = 0x24, scoped, tag = 'DMA stride descriptor']
    %14 = vsyncpa [#allocation8], 0
    %15 = vsyncpa [#allocation9], 0
    // Predicated region
    $region2: #{tpu_custom_call.1} parent=1 // pred_check
      _
    $region3: #{tpu_custom_call.1} parent=1 // pred_check_branch
      %17 = sbr.rel (0) target = $region5
    $region4: #{tpu_custom_call.1} parent=1 // pred_region
      _
    $region5: #{tpu_custom_call.1} parent=1 // pred_fallthru
      _
    // Predicated region
    $region6: #{tpu_custom_call.1} parent=1 // pred_check
      _
    $region7: #{tpu_custom_call.1} parent=1 // pred_check_branch
      %19 = sbr.rel (0) target = $region9
    $region8: #{tpu_custom_call.1} parent=1 // pred_region
      _
    $region9: #{tpu_custom_call.1} parent=1 // pred_fallthru
      _
    // Predicated region
    $region10: #{tpu_custom_call.1} parent=1 // pred_check
      _
    $region11: #{tpu_custom_call.1} parent=1 // pred_check_branch
      %21 = sbr.rel (0) target = $region13
    $region12: #{tpu_custom_call.1} parent=1 // pred_region
      _
    $region13: #{tpu_custom_call.1} parent=1 // pred_fallthru
      _
    // Predicated region
    $region14: #{tpu_custom_call.1} parent=1 // pred_check
      _
    $region15: #{tpu_custom_call.1} parent=1 // pred_check_branch
      %23 = sbr.rel (0) target = $region17
    $region16: #{tpu_custom_call.1} parent=1 // pred_region
      %s25 = ssub.s32 5120, 5120
      %26 = vsyncadd [#allocation8], %s25
      %s27 = sshll.u32 [#allocation7], 4
      %s28 = int_to_ptr.vmem [resolvable:$true] %s27
      %33 = dma.hbm_to_vmem [thread:$0]  %s3, 5120, %s28, [#allocation8], 320, 320, 20
    $region17: #{tpu_custom_call.1} parent=1 // pred_fallthru
      _
    // Predicated region
    $region18: #{tpu_custom_call.1} parent=1 // pred_check
      _
    $region19: #{tpu_custom_call.1} parent=1 // pred_check_branch
      %35 = sbr.rel (0) target = $region21
    $region20: #{tpu_custom_call.1} parent=1 // pred_region
      _
    $region21: #{tpu_custom_call.1} parent=1 // pred_fallthru
      _
    // Predicated region
    $region22: #{tpu_custom_call.1} parent=1 // pred_check
      _
    $region23: #{tpu_custom_call.1} parent=1 // pred_check_branch
      %37 = sbr.rel (0) target = $region25
    $region24: #{tpu_custom_call.1} parent=1 // pred_region
      %38 = dma.done [#allocation8], 5120
    $region25: #{tpu_custom_call.1} parent=1 // pred_fallthru
      _
    %s41 = sshll.u32 1, 14
    %s42 = sxor.u32 4294967295, %s41
    %s44 = sld [smem:[#allocation0]]
    %s45 = sadd.s32 2, %s44
    %s47 = sshll.u32 7, 26
    %s48 = sxor.u32 4294967295, %s47
    %s49 = sand.u32 0, %s48
    %s50 = sshll.u32 %s45, 26
    %s51 = sor.u32 %s49, %s50
    %s52 = sshll.u32 [#allocation2], 4
    %s53 = int_to_ptr.vmem [resolvable:$true] %s52
    %56 = sst [smem:[#allocation12]] 256
    %s57 = scalar_lea.smem [#allocation12], 1
    %58 = sst [smem:[%s57]] 256
    %s59 = scalar_lea.smem [#allocation12], 2
    %60 = sst [smem:[%s59]] 2
    %s61 = scalar_lea.smem [#allocation12], 3
    %62 = sst [smem:[%s61]] 64
    %s63 = scalar_lea.smem [#allocation12], 4
    %64 = sst [smem:[%s63]] 128
    %s65 = scalar_lea.smem [#allocation12], 5
    %66 = sst [smem:[%s65]] 2
    %s67 = scalar_lea.smem [#allocation12], 6
    %68 = sst [smem:[%s67]] 128
    %s69 = scalar_lea.smem [#allocation12], 7
    %70 = sst [smem:[%s69]] 64
    %s71 = scalar_lea.smem [#allocation12], 8
    %72 = sst [smem:[%s71]] 4
    %74 = dma.general %s5, 4096, %s53, [#allocation6], [#allocation11], [#allocation12], %s51, 0
    %s75 = scalar_lea.sflag [#allocation6], 1
    %s77 = sshll.u32 1, 14
    %s78 = sxor.u32 4294967295, %s77
    %s80 = sadd.s32 2, %s44
    %s82 = sshll.u32 7, 26
    %s83 = sxor.u32 4294967295, %s82
    %s84 = sand.u32 0, %s83
    %s85 = sshll.u32 %s80, 26
    %s86 = sor.u32 %s84, %s85
    %s87 = sshll.u32 [#allocation3], 4
    %s88 = int_to_ptr.vmem [resolvable:$true] %s87
    %91 = sst [smem:[#allocation14]] 384
    %s92 = scalar_lea.smem [#allocation14], 1
    %93 = sst [smem:[%s92]] 384
    %s94 = scalar_lea.smem [#allocation14], 2
    %95 = sst [smem:[%s94]] 3
    %s96 = scalar_lea.smem [#allocation14], 3
    %97 = sst [smem:[%s96]] 64
    %s98 = scalar_lea.smem [#allocation14], 4
    %99 = sst [smem:[%s98]] 128
    %s100 = scalar_lea.smem [#allocation14], 5
    %101 = sst [smem:[%s100]] 2
    %s102 = scalar_lea.smem [#allocation14], 6
    %103 = sst [smem:[%s102]] 192
    %s104 = scalar_lea.smem [#allocation14], 7
    %105 = sst [smem:[%s104]] 64
    %s106 = scalar_lea.smem [#allocation14], 8
    %107 = sst [smem:[%s106]] 4
    %109 = dma.general %s6, 6144, %s88, %s75, [#allocation13], [#allocation14], %s86, 0
    %s110 = scalar_lea.sflag [#allocation6], 2
    %s112 = sshll.u32 1, 14
    %s113 = sxor.u32 4294967295, %s112
    %s115 = sadd.s32 2, %s44
    %s117 = sshll.u32 7, 26
    %s118 = sxor.u32 4294967295, %s117
    %s119 = sand.u32 0, %s118
    %s120 = sshll.u32 %s115, 26
    %s121 = sor.u32 %s119, %s120
    %s122 = sshll.u32 [#allocation4], 4
    %s123 = int_to_ptr.vmem [resolvable:$true] %s122
    %126 = sst [smem:[#allocation16]] 256
    %s127 = scalar_lea.smem [#allocation16], 1
    %128 = sst [smem:[%s127]] 256
    %s129 = scalar_lea.smem [#allocation16], 2
    %130 = sst [smem:[%s129]] 2
    %s131 = scalar_lea.smem [#allocation16], 3
    %132 = sst [smem:[%s131]] 64
    %s133 = scalar_lea.smem [#allocation16], 4
    %134 = sst [smem:[%s133]] 128
    %s135 = scalar_lea.smem [#allocation16], 5
    %136 = sst [smem:[%s135]] 2
    %s137 = scalar_lea.smem [#allocation16], 6
    %138 = sst [smem:[%s137]] 128
    %s139 = scalar_lea.smem [#allocation16], 7
    %140 = sst [smem:[%s139]] 64
    %s141 = scalar_lea.smem [#allocation16], 8
    %142 = sst [smem:[%s141]] 4
    %144 = dma.general %s7, 4096, %s123, %s110, [#allocation15], [#allocation16], %s121, 0
    %s145 = scalar_lea.sflag [#allocation6], 3
    %p147 = scmp.lt.u32.totalorder 128, 8
    %p148 = pneg %p147
    // Predicated region
    $region26: #{tpu_custom_call.1} parent=1 // pred_check
      _
    $region27: #{tpu_custom_call.1} parent=1 // pred_check_branch
      %150 = sbr.rel (%p147) target = $region29
    $region28: #{tpu_custom_call.1} parent=1 // pred_region
      %s165 = sand.u32 128, 7
      %p166 = scmp.eq.s32.totalorder %s165, 0
      // Predicated region
      $region41: #{tpu_custom_call.1} parent=28 // pred_check
        %p167 = pneg %p166
      $region42: #{tpu_custom_call.1} parent=28 // pred_check_branch
        %169 = sbr.rel (%p167) target = $region44
      $region43: #{tpu_custom_call.1} parent=28 // pred_region
        loop: start=0, step=1, limit=1
        $region45: #{tpu_custom_call.1} parent=43 // loop_pre_header
          _
        $region46: #{tpu_custom_call.1} parent=43 // loop_header
          %s171 = sphi 0, %s175
          %p172 = scmp.ge.s32.totalorder %s171, 1
          %s176 = sphi %s8, %s8
          %s177 = sphi [#allocation5], [#allocation5]
        $region47: #{tpu_custom_call.1} parent=43 // loop_header_branch
          %174 = sbr.rel (%p172) target = $region51
        $region48: #{tpu_custom_call.1} parent=43 // loop_body
          %v178 = vld [vmem:[%s176] sm:$0xff]
          %179 = vst [vmem:[%s177] sm:$0xff] %v178
          %v180 = vld [vmem:[%s176 + $0x8] sm:$0xff]
          %181 = vst [vmem:[%s177 + $0x8] sm:$0xff] %v180
          %v182 = vld [vmem:[%s176 + $0x10] sm:$0xff]
          %183 = vst [vmem:[%s177 + $0x10] sm:$0xff] %v182
          %v184 = vld [vmem:[%s176 + $0x18] sm:$0xff]
          %185 = vst [vmem:[%s177 + $0x18] sm:$0xff] %v184
          %v186 = vld [vmem:[%s176 + $0x20] sm:$0xff]
          %187 = vst [vmem:[%s177 + $0x20] sm:$0xff] %v186
          %v188 = vld [vmem:[%s176 + $0x28] sm:$0xff]
          %189 = vst [vmem:[%s177 + $0x28] sm:$0xff] %v188
          %v190 = vld [vmem:[%s176 + $0x30] sm:$0xff]
          %191 = vst [vmem:[%s177 + $0x30] sm:$0xff] %v190
          %v192 = vld [vmem:[%s176 + $0x38] sm:$0xff]
          %193 = vst [vmem:[%s177 + $0x38] sm:$0xff] %v192
          %v194 = vld [vmem:[%s176 + $0x40] sm:$0xff]
          %195 = vst [vmem:[%s177 + $0x40] sm:$0xff] %v194
          %v196 = vld [vmem:[%s176 + $0x48] sm:$0xff]
          %197 = vst [vmem:[%s177 + $0x48] sm:$0xff] %v196
          %v198 = vld [vmem:[%s176 + $0x50] sm:$0xff]
          %199 = vst [vmem:[%s177 + $0x50] sm:$0xff] %v198
          %v200 = vld [vmem:[%s176 + $0x58] sm:$0xff]
          %201 = vst [vmem:[%s177 + $0x58] sm:$0xff] %v200
          %v202 = vld [vmem:[%s176 + $0x60] sm:$0xff]
          %203 = vst [vmem:[%s177 + $0x60] sm:$0xff] %v202
          %v204 = vld [vmem:[%s176 + $0x68] sm:$0xff]
          %205 = vst [vmem:[%s177 + $0x68] sm:$0xff] %v204
          %v206 = vld [vmem:[%s176 + $0x70] sm:$0xff]
          %207 = vst [vmem:[%s177 + $0x70] sm:$0xff] %v206
          %v208 = vld [vmem:[%s176 + $0x78] sm:$0xff]
          %209 = vst [vmem:[%s177 + $0x78] sm:$0xff] %v208
        $region49: #{tpu_custom_call.1} parent=43 // loop_footer
          %s175 = sadd.s32 1, %s171
        $region50: #{tpu_custom_call.1} parent=43 // loop_footer_branch
          %170 = sbr.rel target = $region46
        $region51: #{tpu_custom_call.1} parent=43 // loop_exit
          _
      $region44: #{tpu_custom_call.1} parent=28 // pred_fallthru
        _
      %p210 = pneg %p166
      // Predicated region
      $region52: #{tpu_custom_call.1} parent=28 // pred_check
        _
      $region53: #{tpu_custom_call.1} parent=28 // pred_check_branch
        %212 = sbr.rel (%p166) target = $region55
      $region54: #{tpu_custom_call.1} parent=28 // pred_region
        %s213 = sand.u32 128, 7
      $region55: #{tpu_custom_call.1} parent=28 // pred_fallthru
        _
    $region29: #{tpu_custom_call.1} parent=1 // pred_fallthru
      _
    // Predicated region
    $region30: #{tpu_custom_call.1} parent=1 // pred_check
      %p151 = pneg %p147
    $region31: #{tpu_custom_call.1} parent=1 // pred_check_branch
      %153 = sbr.rel (%p151) target = $region33
    $region32: #{tpu_custom_call.1} parent=1 // pred_region
      %s154 = sshllo.u32 0, 128
      loop: start=0, step=1, limit=1
      $region34: #{tpu_custom_call.1} parent=32 // loop_pre_header
        _
      $region35: #{tpu_custom_call.1} parent=32 // loop_header
        %s156 = sphi 0, %s160
        %p157 = scmp.ge.s32.totalorder %s156, 1
        %s161 = sphi %s8, %s8
        %s162 = sphi [#allocation5], [#allocation5]
      $region36: #{tpu_custom_call.1} parent=32 // loop_header_branch
        %159 = sbr.rel (%p157) target = $region40
      $region37: #{tpu_custom_call.1} parent=32 // loop_body
        %v163 = vld [vmem:[%s161] sm:%s154]
        %164 = vst [vmem:[%s162] sm:%s154] %v163
      $region38: #{tpu_custom_call.1} parent=32 // loop_footer
        %s160 = sadd.s32 1, %s156
      $region39: #{tpu_custom_call.1} parent=32 // loop_footer_branch
        %155 = sbr.rel target = $region35
      $region40: #{tpu_custom_call.1} parent=32 // loop_exit
        _
    $region33: #{tpu_custom_call.1} parent=1 // pred_fallthru
      _
    // Predicated region
    $region56: #{tpu_custom_call.1} parent=1 // pred_check
      _
    $region57: #{tpu_custom_call.1} parent=1 // pred_check_branch
      %216 = sbr.rel (0) target = $region59
    $region58: #{tpu_custom_call.1} parent=1 // pred_region
      %217 = vsyncadd %s145, 2048
    $region59: #{tpu_custom_call.1} parent=1 // pred_fallthru
      _
    %v218 = vld [vmem:[%s0] sm:$0xf]
    %v219 = vld [vmem:[%s0 + $0x4] sm:$0xf]
    %v220 = vld [vmem:[%s0 + $0x8] sm:$0xf]
    %v221 = vld [vmem:[%s0 + $0xc] sm:$0xf]
    %v222 = vld [vmem:[%s0 + $0x10] sm:$0xf]
    %v223 = vld [vmem:[%s0 + $0x14] sm:$0xf]
    %v224 = vld [vmem:[%s0 + $0x18] sm:$0xf]
    %v225 = vld [vmem:[%s0 + $0x1c] sm:$0xf]
    %v226 = vld [vmem:[%s0 + $0x20] sm:$0xf]
    %v227 = vld [vmem:[%s0 + $0x24] sm:$0xf]
    %v228 = vld [vmem:[%s0 + $0x28] sm:$0xf]
    %v229 = vld [vmem:[%s0 + $0x2c] sm:$0xf]
    %v230 = vld [vmem:[%s0 + $0x30] sm:$0xf]
    %v231 = vld [vmem:[%s0 + $0x34] sm:$0xf]
    %v232 = vld [vmem:[%s0 + $0x38] sm:$0xf]
    %v233 = vld [vmem:[%s0 + $0x3c] sm:$0xf]
    %v234 = vld [vmem:[%s2] sm:$0xf]
    %v235 = vld [vmem:[%s1] sm:$0xff]
    %v236 = vld [vmem:[%s1 + $0x8] sm:$0xff]
    %v237 = vld [vmem:[%s1 + $0x10] sm:$0xff]
    %v238 = vld [vmem:[%s1 + $0x18] sm:$0xff]
    %v239 = vld [vmem:[%s1 + $0x20] sm:$0xff]
    %v240 = vld [vmem:[%s1 + $0x28] sm:$0xff]
    %v241 = vld [vmem:[%s1 + $0x30] sm:$0xff]
    %v242 = vld [vmem:[%s1 + $0x38] sm:$0xff]
    %v243 = vld [vmem:[%s1 + $0x40] sm:$0xff]
    %v244 = vld [vmem:[%s1 + $0x48] sm:$0xff]
    %v245 = vld [vmem:[%s1 + $0x50] sm:$0xff]
    %v246 = vld [vmem:[%s1 + $0x58] sm:$0xff]
    %v247 = vld [vmem:[%s1 + $0x60] sm:$0xff]
    %v248 = vld [vmem:[%s1 + $0x68] sm:$0xff]
    %v249 = vld [vmem:[%s1 + $0x70] sm:$0xff]
    %v250 = vld [vmem:[%s1 + $0x78] sm:$0xff]
    %252 = vset.pattern.permute.xlu0 0
    %253 = vperm.xlu0 %252, %v235
    %v254 = vpop.permute.xlu0 %253
    %257 = vset.pattern.permute.xlu0 0
    %258 = vperm.xlu0 %257, %v236
    %v259 = vpop.permute.xlu0 %258
    %262 = vset.pattern.permute.xlu0 0
    %263 = vperm.xlu0 %262, %v237
    %v264 = vpop.permute.xlu0 %263
    %267 = vset.pattern.permute.xlu0 0
    %268 = vperm.xlu0 %267, %v238
    %v269 = vpop.permute.xlu0 %268
    %272 = vset.pattern.permute.xlu0 0
    %273 = vperm.xlu0 %272, %v239
    %v274 = vpop.permute.xlu0 %273
    %277 = vset.pattern.permute.xlu0 0
    %278 = vperm.xlu0 %277, %v240
    %v279 = vpop.permute.xlu0 %278
    %282 = vset.pattern.permute.xlu0 0
    %283 = vperm.xlu0 %282, %v241
    %v284 = vpop.permute.xlu0 %283
    %287 = vset.pattern.permute.xlu0 0
    %288 = vperm.xlu0 %287, %v242
    %v289 = vpop.permute.xlu0 %288
    %292 = vset.pattern.permute.xlu0 0
    %293 = vperm.xlu0 %292, %v243
    %v294 = vpop.permute.xlu0 %293
    %297 = vset.pattern.permute.xlu0 0
    %298 = vperm.xlu0 %297, %v244
    %v299 = vpop.permute.xlu0 %298
    %302 = vset.pattern.permute.xlu0 0
    %303 = vperm.xlu0 %302, %v245
    %v304 = vpop.permute.xlu0 %303
    %307 = vset.pattern.permute.xlu0 0
    %308 = vperm.xlu0 %307, %v246
    %v309 = vpop.permute.xlu0 %308
    %312 = vset.pattern.permute.xlu0 0
    %313 = vperm.xlu0 %312, %v247
    %v314 = vpop.permute.xlu0 %313
    %317 = vset.pattern.permute.xlu0 0
    %318 = vperm.xlu0 %317, %v248
    %v319 = vpop.permute.xlu0 %318
    %322 = vset.pattern.permute.xlu0 0
    %323 = vperm.xlu0 %322, %v249
    %v324 = vpop.permute.xlu0 %323
    %327 = vset.pattern.permute.xlu0 0
    %328 = vperm.xlu0 %327, %v250
    %v329 = vpop.permute.xlu0 %328
    %v347 = vunpack.c.l.b16 %v218
    %v348 = vunpack.c.l.b16 %v219
    %v349 = vunpack.c.l.b16 %v220
    %v350 = vunpack.c.l.b16 %v221
    %v351 = vunpack.c.l.b16 %v222
    %v352 = vunpack.c.l.b16 %v223
    %v353 = vunpack.c.l.b16 %v224
    %v354 = vunpack.c.l.b16 %v225
    %v355 = vunpack.c.l.b16 %v226
    %v356 = vunpack.c.l.b16 %v227
    %v357 = vunpack.c.l.b16 %v228
    %v358 = vunpack.c.l.b16 %v229
    %v359 = vunpack.c.l.b16 %v230
    %v360 = vunpack.c.l.b16 %v231
    %v361 = vunpack.c.l.b16 %v232
    %v362 = vunpack.c.l.b16 %v233
    %v363 = vpack.c.b16 %v348, %v347
    %v364 = vpack.c.b16 %v350, %v349
    %v365 = vpack.c.b16 %v352, %v351
    %v366 = vpack.c.b16 %v354, %v353
    %v367 = vpack.c.b16 %v356, %v355
    %v368 = vpack.c.b16 %v358, %v357
    %v369 = vpack.c.b16 %v360, %v359
    %v370 = vpack.c.b16 %v362, %v361
    %vm371 = vcmask 64512
    %v373 = vsel %vm371, %v363, 0
    %v376 = vsel %vm371, %v364, 0
    %v379 = vsel %vm371, %v365, 0
    %v382 = vsel %vm371, %v366, 0
    %v385 = vsel %vm371, %v367, 0
    %v388 = vsel %vm371, %v368, 0
    %v391 = vsel %vm371, %v369, 0
    %v394 = vsel %vm371, %v370, 0
    %vm396 = vcmask 1043456
    %v398 = vsel %vm396, %v234, 0
    %400 = vmatprep.subr.bf16.mxu0 0
    %401 = vmatpush1.bf16.msra.mxu0 %v398
    %402 = vmatprep.subr.bf16.mxu0 0
    %403 = vmatpush1.bf16.msra.mxu0 0
    %404 = vmatprep.subr.bf16.mxu0 0
    %405 = vmatpush1.bf16.msra.mxu0 0
    %406 = vmatprep.subr.bf16.mxu0 0
    %407 = vmatpush1.bf16.msra.mxu0 0
    %408 = vmatprep.subr.bf16.mxu0 0
    %409 = vmatpush1.bf16.msra.mxu0 0
    %410 = vmatprep.subr.bf16.mxu0 0
    %411 = vmatpush1.bf16.msra.mxu0 0
    %412 = vmatprep.subr.bf16.mxu0 0
    %413 = vmatpush1.bf16.msra.mxu0 0
    %414 = vmatprep.subr.bf16.mxu0 0
    %415 = vmatpush1.bf16.msra.mxu0 0
    %416 = vmatprep.subr.bf16.mxu0 0
    %417 = vmatpush1.bf16.msra.mxu0 0
    %418 = vmatprep.subr.bf16.mxu0 0
    %419 = vmatpush1.bf16.msra.mxu0 0
    %420 = vmatprep.subr.bf16.mxu0 0
    %421 = vmatpush1.bf16.msra.mxu0 0
    %422 = vmatprep.subr.bf16.mxu0 0
    %423 = vmatpush1.bf16.msra.mxu0 0
    %424 = vmatprep.subr.bf16.mxu0 0
    %425 = vmatpush1.bf16.msra.mxu0 0
    %426 = vmatprep.subr.bf16.mxu0 0
    %427 = vmatpush1.bf16.msra.mxu0 0
    %428 = vmatprep.subr.bf16.mxu0 0
    %429 = vmatpush1.bf16.msra.mxu0 0
    %430 = vmatprep.subr.bf16.mxu0 0
    %431 = vmatpush1.bf16.msra.mxu0 0
    %432 = vmatprep.mubr.bf16.mxu0 0
    %433 = vmatmul.mubr.bf16.gmra.mrb[0].mxu0 %v373
    %v434 = vpop.f32.mrb[0].mxu0
    %v435 = vadd.f32 %v254, %v434
    %v436 = vpop.f32.mrb[0].mxu0
    %v437 = vpop.f32.mrb[0].mxu0
    %v438 = vadd.f32 %v259, %v437
    %v439 = vpop.f32.mrb[0].mxu0
    %440 = vmatprep.mubr.bf16.mxu0 0
    %441 = vmatmul.mubr.bf16.gmra.mrb[0].mxu0 %v376
    %v442 = vpop.f32.mrb[0].mxu0
    %v443 = vadd.f32 %v264, %v442
    %v444 = vpop.f32.mrb[0].mxu0
    %v445 = vpop.f32.mrb[0].mxu0
    %v446 = vadd.f32 %v269, %v445
    %v447 = vpop.f32.mrb[0].mxu0
    %448 = vmatprep.mubr.bf16.mxu0 0
    %449 = vmatmul.mubr.bf16.gmra.mrb[0].mxu0 %v379
    %v450 = vpop.f32.mrb[0].mxu0
    %v451 = vadd.f32 %v274, %v450
    %v452 = vpop.f32.mrb[0].mxu0
    %v453 = vpop.f32.mrb[0].mxu0
    %v454 = vadd.f32 %v279, %v453
    %v455 = vpop.f32.mrb[0].mxu0
    %456 = vmatprep.mubr.bf16.mxu0 0
    %457 = vmatmul.mubr.bf16.gmra.mrb[0].mxu0 %v382
    %v458 = vpop.f32.mrb[0].mxu0
    %v459 = vadd.f32 %v284, %v458
    %v460 = vpop.f32.mrb[0].mxu0
    %v461 = vpop.f32.mrb[0].mxu0
    %v462 = vadd.f32 %v289, %v461
    %v463 = vpop.f32.mrb[0].mxu0
    %464 = vmatprep.mubr.bf16.mxu0 0
    %465 = vmatmul.mubr.bf16.gmra.mrb[0].mxu0 %v385
    %v466 = vpop.f32.mrb[0].mxu0
    %v467 = vadd.f32 %v294, %v466
    %v468 = vpop.f32.mrb[0].mxu0
    %v469 = vpop.f32.mrb[0].mxu0
    %v470 = vadd.f32 %v299, %v469
    %v471 = vpop.f32.mrb[0].mxu0
    %472 = vmatprep.mubr.bf16.mxu0 0
    %473 = vmatmul.mubr.bf16.gmra.mrb[0].mxu0 %v388
    %v474 = vpop.f32.mrb[0].mxu0
    %v475 = vadd.f32 %v304, %v474
    %v476 = vpop.f32.mrb[0].mxu0
    %v477 = vpop.f32.mrb[0].mxu0
    %v478 = vadd.f32 %v309, %v477
    %v479 = vpop.f32.mrb[0].mxu0
    %480 = vmatprep.mubr.bf16.mxu0 0
    %481 = vmatmul.mubr.bf16.gmra.mrb[0].mxu0 %v391
    %v482 = vpop.f32.mrb[0].mxu0
    %v483 = vadd.f32 %v314, %v482
    %v484 = vpop.f32.mrb[0].mxu0
    %v485 = vpop.f32.mrb[0].mxu0
    %v486 = vadd.f32 %v319, %v485
    %v487 = vpop.f32.mrb[0].mxu0
    %488 = vmatprep.mubr.bf16.mxu0 0
    %489 = vmatmul.mubr.bf16.gmra.mrb[0].mxu0 %v394
    %v490 = vpop.f32.mrb[0].mxu0
    %v491 = vadd.f32 %v324, %v490
    %v492 = vpop.f32.mrb[0].mxu0
    %v493 = vpop.f32.mrb[0].mxu0
    %v494 = vadd.f32 %v329, %v493
    %v495 = vpop.f32.mrb[0].mxu0
    %496 = vdwg.mxu0
    %v497 = vmax.f32 %v435, 0.0
    %v498 = vmax.f32 %v438, 0.0
    %v499 = vmax.f32 %v443, 0.0
    %v500 = vmax.f32 %v446, 0.0
    %v501 = vmax.f32 %v451, 0.0
    %v502 = vmax.f32 %v454, 0.0
    %v503 = vmax.f32 %v459, 0.0
    %v504 = vmax.f32 %v462, 0.0
    %v505 = vmax.f32 %v467, 0.0
    %v506 = vmax.f32 %v470, 0.0
    %v507 = vmax.f32 %v475, 0.0
    %v508 = vmax.f32 %v478, 0.0
    %v509 = vmax.f32 %v483, 0.0
    %v510 = vmax.f32 %v486, 0.0
    %v511 = vmax.f32 %v491, 0.0
    %v512 = vmax.f32 %v494, 0.0
    %v513 = vmin.f32 %v497, %v501
    %v514 = vmin.f32 %v498, %v502
    %v515 = vmin.f32 %v499, %v503
    %v516 = vmin.f32 %v500, %v504
    %v517 = vmin.f32 %v513, %v514
    %v518 = vmin.f32 %v515, %v516
    %v519 = vmin.f32 %v517, %v518
    %v520 = vrot.slane %v519, 4
    %v521 = vmin.f32 %v519, %v520
    %v522 = vrot.slane %v521, 2
    %v523 = vmin.f32 %v521, %v522
    %v524 = vrot.slane %v523, 1
    %v525 = vmin.f32 %v523, %v524
    %v526 = vmin.f32 %v505, %v509
    %v527 = vmin.f32 %v506, %v510
    %v528 = vmin.f32 %v507, %v511
    %v529 = vmin.f32 %v508, %v512
    %v530 = vmin.f32 %v526, %v527
    %v531 = vmin.f32 %v528, %v529
    %v532 = vmin.f32 %v530, %v531
    %v533 = vrot.slane %v532, 4
    %v534 = vmin.f32 %v532, %v533
    %v535 = vrot.slane %v534, 2
    %v536 = vmin.f32 %v534, %v535
    %v537 = vrot.slane %v536, 1
    %v538 = vmin.f32 %v536, %v537
    %vm539 = vcmask 1040384
    %v540 = vsel %vm539, %v525, %v538
    %v541 = vrsqrt.pop %v540
    %v542 = vmul.f32 %v540, %v541
    %vm543 = vcmp.eq.f32.partialorder %v540, inf
    %v544 = vsel %vm543, %v540, %v542
    %vm545 = vcmp.eq.f32.partialorder %v540, 0.0
    %v546 = vand.u32 %v540, 2147483648
    %v547 = vsel %vm545, %v546, %v544
    %v548 = vld [vmem:[#allocation7] sm:$0xff]
    %v549 = vld [vmem:[#allocation7 + $0x8] sm:$0xff]
    %v550 = vld [vmem:[#allocation7 + $0x10] sm:$0xf]
    %v551 = vld [vmem:[#allocation7 + $0x14] sm:$0xff]
    %v552 = vld [vmem:[#allocation7 + $0x1c] sm:$0xff]
    %v553 = vld [vmem:[#allocation7 + $0x24] sm:$0xf]
    %v554 = vld [vmem:[#allocation7 + $0x28] sm:$0xff]
    %v555 = vld [vmem:[#allocation7 + $0x30] sm:$0xff]
    %v556 = vld [vmem:[#allocation7 + $0x38] sm:$0xf]
    %v557 = vld [vmem:[#allocation7 + $0x3c] sm:$0xff]
    %v558 = vld [vmem:[#allocation7 + $0x44] sm:$0xff]
    %v559 = vld [vmem:[#allocation7 + $0x4c] sm:$0xf]
    %v560 = vld [vmem:[#allocation7 + $0x50] sm:$0xff]
    %v561 = vld [vmem:[#allocation7 + $0x58] sm:$0xff]
    %v562 = vld [vmem:[#allocation7 + $0x60] sm:$0xf]
    %v563 = vld [vmem:[#allocation7 + $0x64] sm:$0xff]
    %v564 = vld [vmem:[#allocation7 + $0x6c] sm:$0xff]
    %v565 = vld [vmem:[#allocation7 + $0x74] sm:$0xf]
    %v566 = vld [vmem:[#allocation7 + $0x78] sm:$0xff]
    %v567 = vld [vmem:[#allocation7 + $0x80] sm:$0xff]
    %v568 = vld [vmem:[#allocation7 + $0x88] sm:$0xf]
    %v569 = vld [vmem:[#allocation7 + $0x8c] sm:$0xff]
    %v570 = vld [vmem:[#allocation7 + $0x94] sm:$0xff]
    %v571 = vld [vmem:[#allocation7 + $0x9c] sm:$0xf]
    %v572 = vld [vmem:[#allocation7 + $0xa0] sm:$0xff]
    %v573 = vld [vmem:[#allocation7 + $0xa8] sm:$0xff]
    %v574 = vld [vmem:[#allocation7 + $0xb0] sm:$0xf]
    %v575 = vld [vmem:[#allocation7 + $0xb4] sm:$0xff]
    %v576 = vld [vmem:[#allocation7 + $0xbc] sm:$0xff]
    %v577 = vld [vmem:[#allocation7 + $0xc4] sm:$0xf]
    %v578 = vld [vmem:[#allocation7 + $0xc8] sm:$0xff]
    %v579 = vld [vmem:[#allocation7 + $0xd0] sm:$0xff]
    %v580 = vld [vmem:[#allocation7 + $0xd8] sm:$0xf]
    %v581 = vld [vmem:[#allocation7 + $0xdc] sm:$0xff]
    %v582 = vld [vmem:[#allocation7 + $0xe4] sm:$0xff]
    %v583 = vld [vmem:[#allocation7 + $0xec] sm:$0xf]
    %v584 = vld [vmem:[#allocation7 + $0xf0] sm:$0xff]
    %v585 = vld [vmem:[#allocation7 + $0xf8] sm:$0xff]
    %v586 = vld [vmem:[#allocation7 + $0x100] sm:$0xf]
    %v587 = vld [vmem:[#allocation7 + $0x104] sm:$0xff]
    %v588 = vld [vmem:[#allocation7 + $0x10c] sm:$0xff]
    %v589 = vld [vmem:[#allocation7 + $0x114] sm:$0xf]
    %v590 = vld [vmem:[#allocation7 + $0x118] sm:$0xff]
    %v591 = vld [vmem:[#allocation7 + $0x120] sm:$0xff]
    %v592 = vld [vmem:[#allocation7 + $0x128] sm:$0xf]
    %v593 = vld [vmem:[#allocation7 + $0x12c] sm:$0xff]
    %v594 = vld [vmem:[#allocation7 + $0x134] sm:$0xff]
    %v595 = vld [vmem:[#allocation7 + $0x13c] sm:$0xf]
    %v596 = vpack.c.bf16 %v547, %v547
    %v645 = vunpack.c.l.b16 %v548
    %v646 = vunpack.c.h.b16 %v548
    %v647 = vunpack.c.l.b16 %v549
    %v648 = vunpack.c.h.b16 %v549
    %v649 = vunpack.c.l.b16 %v550
    %v650 = vunpack.c.l.b16 %v551
    %v651 = vunpack.c.h.b16 %v551
    %v652 = vunpack.c.l.b16 %v552
    %v653 = vunpack.c.h.b16 %v552
    %v654 = vunpack.c.l.b16 %v553
    %v655 = vunpack.c.l.b16 %v554
    %v656 = vunpack.c.h.b16 %v554
    %v657 = vunpack.c.l.b16 %v555
    %v658 = vunpack.c.h.b16 %v555
    %v659 = vunpack.c.l.b16 %v556
    %v660 = vunpack.c.l.b16 %v557
    %v661 = vunpack.c.h.b16 %v557
    %v662 = vunpack.c.l.b16 %v558
    %v663 = vunpack.c.h.b16 %v558
    %v664 = vunpack.c.l.b16 %v559
    %v665 = vunpack.c.l.b16 %v560
    %v666 = vunpack.c.h.b16 %v560
    %v667 = vunpack.c.l.b16 %v561
    %v668 = vunpack.c.h.b16 %v561
    %v669 = vunpack.c.l.b16 %v562
    %v670 = vunpack.c.l.b16 %v563
    %v671 = vunpack.c.h.b16 %v563
    %v672 = vunpack.c.l.b16 %v564
    %v673 = vunpack.c.h.b16 %v564
    %v674 = vunpack.c.l.b16 %v565
    %v675 = vunpack.c.l.b16 %v566
    %v676 = vunpack.c.h.b16 %v566
    %v677 = vunpack.c.l.b16 %v567
    %v678 = vunpack.c.h.b16 %v567
    %v679 = vunpack.c.l.b16 %v568
    %v680 = vunpack.c.l.b16 %v569
    %v681 = vunpack.c.h.b16 %v569
    %v682 = vunpack.c.l.b16 %v570
    %v683 = vunpack.c.h.b16 %v570
    %v684 = vunpack.c.l.b16 %v571
    %v685 = vunpack.c.l.b16 %v572
    %v686 = vunpack.c.h.b16 %v572
    %v687 = vunpack.c.l.b16 %v573
    %v688 = vunpack.c.h.b16 %v573
    %v689 = vunpack.c.l.b16 %v574
    %v690 = vunpack.c.l.b16 %v575
    %v691 = vunpack.c.h.b16 %v575
    %v692 = vunpack.c.l.b16 %v576
    %v693 = vunpack.c.h.b16 %v576
    %v694 = vunpack.c.l.b16 %v577
    %v695 = vunpack.c.l.b16 %v578
    %v696 = vunpack.c.h.b16 %v578
    %v697 = vunpack.c.l.b16 %v579
    %v698 = vunpack.c.h.b16 %v579
    %v699 = vunpack.c.l.b16 %v580
    %v700 = vunpack.c.l.b16 %v581
    %v701 = vunpack.c.h.b16 %v581
    %v702 = vunpack.c.l.b16 %v582
    %v703 = vunpack.c.h.b16 %v582
    %v704 = vunpack.c.l.b16 %v583
    %v705 = vunpack.c.l.b16 %v584
    %v706 = vunpack.c.h.b16 %v584
    %v707 = vunpack.c.l.b16 %v585
    %v708 = vunpack.c.h.b16 %v585
    %v709 = vunpack.c.l.b16 %v586
    %v710 = vunpack.c.l.b16 %v587
    %v711 = vunpack.c.h.b16 %v587
    %v712 = vunpack.c.l.b16 %v588
    %v713 = vunpack.c.h.b16 %v588
    %v714 = vunpack.c.l.b16 %v589
    %v715 = vunpack.c.l.b16 %v590
    %v716 = vunpack.c.h.b16 %v590
    %v717 = vunpack.c.l.b16 %v591
    %v718 = vunpack.c.h.b16 %v591
    %v719 = vunpack.c.l.b16 %v592
    %v720 = vunpack.c.l.b16 %v593
    %v721 = vunpack.c.h.b16 %v593
    %v722 = vunpack.c.l.b16 %v594
    %v723 = vunpack.c.h.b16 %v594
    %v724 = vunpack.c.l.b16 %v595
    %v725 = vpack.c.b16 %v650, %v645
    %v726 = vpack.c.b16 %v651, %v646
    %v727 = vpack.c.b16 %v652, %v647
    %v728 = vpack.c.b16 %v653, %v648
    %v729 = vpack.c.b16 %v654, %v649
    %v730 = vpack.c.b16 %v660, %v655
    %v731 = vpack.c.b16 %v661, %v656
    %v732 = vpack.c.b16 %v662, %v657
    %v733 = vpack.c.b16 %v663, %v658
    %v734 = vpack.c.b16 %v664, %v659
    %v735 = vpack.c.b16 %v670, %v665
    %v736 = vpack.c.b16 %v671, %v666
    %v737 = vpack.c.b16 %v672, %v667
    %v738 = vpack.c.b16 %v673, %v668
    %v739 = vpack.c.b16 %v674, %v669
    %v740 = vpack.c.b16 %v680, %v675
    %v741 = vpack.c.b16 %v681, %v676
    %v742 = vpack.c.b16 %v682, %v677
    %v743 = vpack.c.b16 %v683, %v678
    %v744 = vpack.c.b16 %v684, %v679
    %v745 = vpack.c.b16 %v690, %v685
    %v746 = vpack.c.b16 %v691, %v686
    %v747 = vpack.c.b16 %v692, %v687
    %v748 = vpack.c.b16 %v693, %v688
    %v749 = vpack.c.b16 %v694, %v689
    %v750 = vpack.c.b16 %v700, %v695
    %v751 = vpack.c.b16 %v701, %v696
    %v752 = vpack.c.b16 %v702, %v697
    %v753 = vpack.c.b16 %v703, %v698
    %v754 = vpack.c.b16 %v704, %v699
    %v755 = vpack.c.b16 %v710, %v705
    %v756 = vpack.c.b16 %v711, %v706
    %v757 = vpack.c.b16 %v712, %v707
    %v758 = vpack.c.b16 %v713, %v708
    %v759 = vpack.c.b16 %v714, %v709
    %v760 = vpack.c.b16 %v720, %v715
    %v761 = vpack.c.b16 %v721, %v716
    %v762 = vpack.c.b16 %v722, %v717
    %v763 = vpack.c.b16 %v723, %v718
    %v764 = vpack.c.b16 %v724, %v719
    %805 = vmatprep.subr.bf16.mxu0 %v726
    %806 = vmatpush1.bf16.msra.mxu0 %v725
    %807 = vmatprep.subr.bf16.mxu0 %v731
    %808 = vmatpush1.bf16.msra.mxu0 %v730
    %809 = vmatprep.subr.bf16.mxu0 %v736
    %810 = vmatpush1.bf16.msra.mxu0 %v735
    %811 = vmatprep.subr.bf16.mxu0 %v741
    %812 = vmatpush1.bf16.msra.mxu0 %v740
    %813 = vmatprep.subr.bf16.mxu0 %v746
    %814 = vmatpush1.bf16.msra.mxu0 %v745
    %815 = vmatprep.subr.bf16.mxu0 %v751
    %816 = vmatpush1.bf16.msra.mxu0 %v750
    %817 = vmatprep.subr.bf16.mxu0 %v756
    %818 = vmatpush1.bf16.msra.mxu0 %v755
    %819 = vmatprep.subr.bf16.mxu0 %v761
    %820 = vmatpush1.bf16.msra.mxu0 %v760
    %821 = vmatprep.subr.bf16.mxu0 0
    %822 = vmatpush1.bf16.msra.mxu0 0
    %823 = vmatprep.subr.bf16.mxu0 0
    %824 = vmatpush1.bf16.msra.mxu0 0
    %825 = vmatprep.subr.bf16.mxu0 0
    %826 = vmatpush1.bf16.msra.mxu0 0
    %827 = vmatprep.subr.bf16.mxu0 0
    %828 = vmatpush1.bf16.msra.mxu0 0
    %829 = vmatprep.subr.bf16.mxu0 0
    %830 = vmatpush1.bf16.msra.mxu0 0
    %831 = vmatprep.subr.bf16.mxu0 0
    %832 = vmatpush1.bf16.msra.mxu0 0
    %833 = vmatprep.subr.bf16.mxu0 0
    %834 = vmatpush1.bf16.msra.mxu0 0
    %835 = vmatprep.subr.bf16.mxu0 0
    %836 = vmatpush1.bf16.msra.mxu0 0
    %837 = vmatprep.mubr.bf16.mxu0 0
    %838 = vmatmul.mubr.bf16.gmra.mrb[0].mxu0 %v596
    %v839 = vpop.f32.mrb[0].mxu0
    %v840 = vadd.f32 0.0, %v839
    %v841 = vpop.f32.mrb[0].mxu0
    %v842 = vadd.f32 0.0, %v841
    %v843 = vpop.f32.mrb[0].mxu0
    %v844 = vpop.f32.mrb[0].mxu0
    %845 = vdwg.mxu0
    %846 = vmatprep.subr.bf16.mxu0 %v728
    %847 = vmatpush1.bf16.msra.mxu0 %v727
    %848 = vmatprep.subr.bf16.mxu0 %v733
    %849 = vmatpush1.bf16.msra.mxu0 %v732
    %850 = vmatprep.subr.bf16.mxu0 %v738
    %851 = vmatpush1.bf16.msra.mxu0 %v737
    %852 = vmatprep.subr.bf16.mxu0 %v743
    %853 = vmatpush1.bf16.msra.mxu0 %v742
    %854 = vmatprep.subr.bf16.mxu0 %v748
    %855 = vmatpush1.bf16.msra.mxu0 %v747
    %856 = vmatprep.subr.bf16.mxu0 %v753
    %857 = vmatpush1.bf16.msra.mxu0 %v752
    %858 = vmatprep.subr.bf16.mxu0 %v758
    %859 = vmatpush1.bf16.msra.mxu0 %v757
    %860 = vmatprep.subr.bf16.mxu0 %v763
    %861 = vmatpush1.bf16.msra.mxu0 %v762
    %862 = vmatprep.subr.bf16.mxu0 0
    %863 = vmatpush1.bf16.msra.mxu0 0
    %864 = vmatprep.subr.bf16.mxu0 0
    %865 = vmatpush1.bf16.msra.mxu0 0
    %866 = vmatprep.subr.bf16.mxu0 0
    %867 = vmatpush1.bf16.msra.mxu0 0
    %868 = vmatprep.subr.bf16.mxu0 0
    %869 = vmatpush1.bf16.msra.mxu0 0
    %870 = vmatprep.subr.bf16.mxu0 0
    %871 = vmatpush1.bf16.msra.mxu0 0
    %872 = vmatprep.subr.bf16.mxu0 0
    %873 = vmatpush1.bf16.msra.mxu0 0
    %874 = vmatprep.subr.bf16.mxu0 0
    %875 = vmatpush1.bf16.msra.mxu0 0
    %876 = vmatprep.subr.bf16.mxu0 0
    %877 = vmatpush1.bf16.msra.mxu0 0
    %878 = vmatprep.mubr.bf16.mxu0 0
    %879 = vmatmul.mubr.bf16.gmra.mrb[0].mxu0 %v596
    %v880 = vpop.f32.mrb[0].mxu0
    %v881 = vadd.f32 0.0, %v880
    %v882 = vpop.f32.mrb[0].mxu0
    %v883 = vadd.f32 0.0, %v882
    %v884 = vpop.f32.mrb[0].mxu0
    %v885 = vpop.f32.mrb[0].mxu0
    %886 = vdwg.mxu0
    %887 = vmatprep.subr.bf16.mxu0 0
    %888 = vmatpush1.bf16.msra.mxu0 %v729
    %889 = vmatprep.subr.bf16.mxu0 0
    %890 = vmatpush1.bf16.msra.mxu0 %v734
    %891 = vmatprep.subr.bf16.mxu0 0
    %892 = vmatpush1.bf16.msra.mxu0 %v739
    %893 = vmatprep.subr.bf16.mxu0 0
    %894 = vmatpush1.bf16.msra.mxu0 %v744
    %895 = vmatprep.subr.bf16.mxu0 0
    %896 = vmatpush1.bf16.msra.mxu0 %v749
    %897 = vmatprep.subr.bf16.mxu0 0
    %898 = vmatpush1.bf16.msra.mxu0 %v754
    %899 = vmatprep.subr.bf16.mxu0 0
    %900 = vmatpush1.bf16.msra.mxu0 %v759
    %901 = vmatprep.subr.bf16.mxu0 0
    %902 = vmatpush1.bf16.msra.mxu0 %v764
    %903 = vmatprep.subr.bf16.mxu0 0
    %904 = vmatpush1.bf16.msra.mxu0 0
    %905 = vmatprep.subr.bf16.mxu0 0
    %906 = vmatpush1.bf16.msra.mxu0 0
    %907 = vmatprep.subr.bf16.mxu0 0
    %908 = vmatpush1.bf16.msra.mxu0 0
    %909 = vmatprep.subr.bf16.mxu0 0
    %910 = vmatpush1.bf16.msra.mxu0 0
    %911 = vmatprep.subr.bf16.mxu0 0
    %912 = vmatpush1.bf16.msra.mxu0 0
    %913 = vmatprep.subr.bf16.mxu0 0
    %914 = vmatpush1.bf16.msra.mxu0 0
    %915 = vmatprep.subr.bf16.mxu0 0
    %916 = vmatpush1.bf16.msra.mxu0 0
    %917 = vmatprep.subr.bf16.mxu0 0
    %918 = vmatpush1.bf16.msra.mxu0 0
    %919 = vmatprep.mubr.bf16.mxu0 0
    %920 = vmatmul.mubr.bf16.gmra.mrb[0].mxu0 %v596
    %v921 = vpop.f32.mrb[0].mxu0
    %v922 = vadd.f32 0.0, %v921
    %v923 = vpop.f32.mrb[0].mxu0
    %v924 = vpop.f32.mrb[0].mxu0
    %v925 = vpop.f32.mrb[0].mxu0
    %926 = vdwg.mxu0
    %v927 = vld [vmem:[%s4] ss:$8 sm:$0x3]
    %v929 = vlaneseq
    %v930 = vshrl.u32 %v929, 7
    %v931 = vsub.s32 0, %v930
    %v932 = vrot.slane %v927, %v931
    %v933 = vlaneseq
    %v934 = vshrl.u32 %v933, 7
    %v935 = vsub.s32 1, %v934
    %v936 = vrot.slane %v927, %v935
    %v939 = vadd.f32 %v840, %v932
    %v940 = vadd.f32 %v842, %v936
    %v941 = vmax.f32 %v939, 0.0
    %v942 = vmax.f32 %v940, 0.0
    %s943 = smul.u32 4, 32
    %s944 = smul.u32 %s943, 2
    %s945 = sshll.u32 %s944, 4
    %946 = dma.done [#allocation6], %s945
    %v947 = vld [vmem:[#allocation2] sm:$0xff]
    %v948 = vld [vmem:[#allocation2 + $0x8] sm:$0xff]
    %v949 = vld [vmem:[#allocation2 + $0x10] sm:$0xff]
    %v950 = vld [vmem:[#allocation2 + $0x18] sm:$0xff]
    %v951 = vld [vmem:[#allocation2 + $0x20] sm:$0xff]
    %v952 = vld [vmem:[#allocation2 + $0x28] sm:$0xff]
    %v953 = vld [vmem:[#allocation2 + $0x30] sm:$0xff]
    %v954 = vld [vmem:[#allocation2 + $0x38] sm:$0xff]
    %v955 = vld [vmem:[#allocation2 + $0x40] sm:$0xff]
    %v956 = vld [vmem:[#allocation2 + $0x48] sm:$0xff]
    %v957 = vld [vmem:[#allocation2 + $0x50] sm:$0xff]
    %v958 = vld [vmem:[#allocation2 + $0x58] sm:$0xff]
    %v959 = vld [vmem:[#allocation2 + $0x60] sm:$0xff]
    %v960 = vld [vmem:[#allocation2 + $0x68] sm:$0xff]
    %v961 = vld [vmem:[#allocation2 + $0x70] sm:$0xff]
    %v962 = vld [vmem:[#allocation2 + $0x78] sm:$0xff]
    %v963 = vld [vmem:[#allocation2 + $0x80] sm:$0xff]
    %v964 = vld [vmem:[#allocation2 + $0x88] sm:$0xff]
    %v965 = vld [vmem:[#allocation2 + $0x90] sm:$0xff]
    %v966 = vld [vmem:[#allocation2 + $0x98] sm:$0xff]
    %v967 = vld [vmem:[#allocation2 + $0xa0] sm:$0xff]
    %v968 = vld [vmem:[#allocation2 + $0xa8] sm:$0xff]
    %v969 = vld [vmem:[#allocation2 + $0xb0] sm:$0xff]
    %v970 = vld [vmem:[#allocation2 + $0xb8] sm:$0xff]
    %v971 = vld [vmem:[#allocation2 + $0xc0] sm:$0xff]
    %v972 = vld [vmem:[#allocation2 + $0xc8] sm:$0xff]
    %v973 = vld [vmem:[#allocation2 + $0xd0] sm:$0xff]
    %v974 = vld [vmem:[#allocation2 + $0xd8] sm:$0xff]
    %v975 = vld [vmem:[#allocation2 + $0xe0] sm:$0xff]
    %v976 = vld [vmem:[#allocation2 + $0xe8] sm:$0xff]
    %v977 = vld [vmem:[#allocation2 + $0xf0] sm:$0xff]
    %v978 = vld [vmem:[#allocation2 + $0xf8] sm:$0xff]
    %v979 = vpack.c.bf16 %v941, %v941
    %v980 = vpack.c.bf16 %v942, %v942
    %s981 = scalar_lea.vmem %s4, 1
    %v982 = vld [vmem:[%s981] ss:$8 sm:$0x3]
    %v984 = vlaneseq
    %v985 = vshrl.u32 %v984, 7
    %v986 = vsub.s32 0, %v985
    %v987 = vrot.slane %v982, %v986
    %v988 = vlaneseq
    %v989 = vshrl.u32 %v988, 7
    %v990 = vsub.s32 1, %v989
    %v991 = vrot.slane %v982, %v990
    %994 = vmatprep.subr.bf16.mxu0 %v948
    %995 = vmatpush1.bf16.msra.mxu0 %v947
    %996 = vmatprep.subr.bf16.mxu0 %v950
    %997 = vmatpush1.bf16.msra.mxu0 %v949
    %998 = vmatprep.subr.bf16.mxu0 %v952
    %999 = vmatpush1.bf16.msra.mxu0 %v951
    %1000 = vmatprep.subr.bf16.mxu0 %v954
    %1001 = vmatpush1.bf16.msra.mxu0 %v953
    %1002 = vmatprep.subr.bf16.mxu0 %v956
    %1003 = vmatpush1.bf16.msra.mxu0 %v955
    %1004 = vmatprep.subr.bf16.mxu0 %v958
    %1005 = vmatpush1.bf16.msra.mxu0 %v957
    %1006 = vmatprep.subr.bf16.mxu0 %v960
    %1007 = vmatpush1.bf16.msra.mxu0 %v959
    %1008 = vmatprep.subr.bf16.mxu0 %v962
    %1009 = vmatpush1.bf16.msra.mxu0 %v961
    %1010 = vmatprep.subr.bf16.mxu0 %v964
    %1011 = vmatpush1.bf16.msra.mxu0 %v963
    %1012 = vmatprep.subr.bf16.mxu0 %v966
    %1013 = vmatpush1.bf16.msra.mxu0 %v965
    %1014 = vmatprep.subr.bf16.mxu0 %v968
    %1015 = vmatpush1.bf16.msra.mxu0 %v967
    %1016 = vmatprep.subr.bf16.mxu0 %v970
    %1017 = vmatpush1.bf16.msra.mxu0 %v969
    %1018 = vmatprep.subr.bf16.mxu0 %v972
    %1019 = vmatpush1.bf16.msra.mxu0 %v971
    %1020 = vmatprep.subr.bf16.mxu0 %v974
    %1021 = vmatpush1.bf16.msra.mxu0 %v973
    %1022 = vmatprep.subr.bf16.mxu0 %v976
    %1023 = vmatpush1.bf16.msra.mxu0 %v975
    %1024 = vmatprep.subr.bf16.mxu0 %v978
    %1025 = vmatpush1.bf16.msra.mxu0 %v977
    %1026 = vmatprep.mubr.bf16.mxu0 %v980
    %1027 = vmatmul.mubr.bf16.gmra.mrb[0].mxu0 %v979
    %v1028 = vpop.f32.mrb[0].mxu0
    %v1029 = vadd.f32 %v987, %v1028
    %v1030 = vpop.f32.mrb[0].mxu0
    %v1031 = vadd.f32 %v991, %v1030
    %v1032 = vpop.f32.mrb[0].mxu0
    %v1033 = vpop.f32.mrb[0].mxu0
    %1034 = vdwg.mxu0
    %v1035 = vmax.f32 %v1029, 0.0
    %v1036 = vmax.f32 %v1031, 0.0
    %s1037 = smul.u32 %s943, 3
    %s1038 = sshll.u32 %s1037, 4
    %1039 = dma.done %s75, %s1038
    %v1040 = vld [vmem:[#allocation3] sm:$0xff]
    %v1041 = vld [vmem:[#allocation3 + $0x8] sm:$0xff]
    %v1042 = vld [vmem:[#allocation3 + $0x10] sm:$0xff]
    %v1043 = vld [vmem:[#allocation3 + $0x18] sm:$0xff]
    %v1044 = vld [vmem:[#allocation3 + $0x20] sm:$0xff]
    %v1045 = vld [vmem:[#allocation3 + $0x28] sm:$0xff]
    %v1046 = vld [vmem:[#allocation3 + $0x30] sm:$0xff]
    %v1047 = vld [vmem:[#allocation3 + $0x38] sm:$0xff]
    %v1048 = vld [vmem:[#allocation3 + $0x40] sm:$0xff]
    %v1049 = vld [vmem:[#allocation3 + $0x48] sm:$0xff]
    %v1050 = vld [vmem:[#allocation3 + $0x50] sm:$0xff]
    %v1051 = vld [vmem:[#allocation3 + $0x58] sm:$0xff]
    %v1052 = vld [vmem:[#allocation3 + $0x60] sm:$0xff]
    %v1053 = vld [vmem:[#allocation3 + $0x68] sm:$0xff]
    %v1054 = vld [vmem:[#allocation3 + $0x70] sm:$0xff]
    %v1055 = vld [vmem:[#allocation3 + $0x78] sm:$0xff]
    %v1056 = vld [vmem:[#allocation3 + $0x80] sm:$0xff]
    %v1057 = vld [vmem:[#allocation3 + $0x88] sm:$0xff]
    %v1058 = vld [vmem:[#allocation3 + $0x90] sm:$0xff]
    %v1059 = vld [vmem:[#allocation3 + $0x98] sm:$0xff]
    %v1060 = vld [vmem:[#allocation3 + $0xa0] sm:$0xff]
    %v1061 = vld [vmem:[#allocation3 + $0xa8] sm:$0xff]
    %v1062 = vld [vmem:[#allocation3 + $0xb0] sm:$0xff]
    %v1063 = vld [vmem:[#allocation3 + $0xb8] sm:$0xff]
    %v1064 = vld [vmem:[#allocation3 + $0xc0] sm:$0xff]
    %v1065 = vld [vmem:[#allocation3 + $0xc8] sm:$0xff]
    %v1066 = vld [vmem:[#allocation3 + $0xd0] sm:$0xff]
    %v1067 = vld [vmem:[#allocation3 + $0xd8] sm:$0xff]
    %v1068 = vld [vmem:[#allocation3 + $0xe0] sm:$0xff]
    %v1069 = vld [vmem:[#allocation3 + $0xe8] sm:$0xff]
    %v1070 = vld [vmem:[#allocation3 + $0xf0] sm:$0xff]
    %v1071 = vld [vmem:[#allocation3 + $0xf8] sm:$0xff]
    %v1072 = vld [vmem:[#allocation3 + $0x100] sm:$0xff]
    %v1073 = vld [vmem:[#allocation3 + $0x108] sm:$0xff]
    %v1074 = vld [vmem:[#allocation3 + $0x110] sm:$0xff]
    %v1075 = vld [vmem:[#allocation3 + $0x118] sm:$0xff]
    %v1076 = vld [vmem:[#allocation3 + $0x120] sm:$0xff]
    %v1077 = vld [vmem:[#allocation3 + $0x128] sm:$0xff]
    %v1078 = vld [vmem:[#allocation3 + $0x130] sm:$0xff]
    %v1079 = vld [vmem:[#allocation3 + $0x138] sm:$0xff]
    %v1080 = vld [vmem:[#allocation3 + $0x140] sm:$0xff]
    %v1081 = vld [vmem:[#allocation3 + $0x148] sm:$0xff]
    %v1082 = vld [vmem:[#allocation3 + $0x150] sm:$0xff]
    %v1083 = vld [vmem:[#allocation3 + $0x158] sm:$0xff]
    %v1084 = vld [vmem:[#allocation3 + $0x160] sm:$0xff]
    %v1085 = vld [vmem:[#allocation3 + $0x168] sm:$0xff]
    %v1086 = vld [vmem:[#allocation3 + $0x170] sm:$0xff]
    %v1087 = vld [vmem:[#allocation3 + $0x178] sm:$0xff]
    %v1088 = vpack.c.bf16 %v1035, %v1035
    %v1089 = vpack.c.bf16 %v1036, %v1036
    %1090 = vmatprep.subr.bf16.mxu0 %v1041
    %1091 = vmatpush1.bf16.msra.mxu0 %v1040
    %1092 = vmatprep.subr.bf16.mxu0 %v1044
    %1093 = vmatpush1.bf16.msra.mxu0 %v1043
    %1094 = vmatprep.subr.bf16.mxu0 %v1047
    %1095 = vmatpush1.bf16.msra.mxu0 %v1046
    %1096 = vmatprep.subr.bf16.mxu0 %v1050
    %1097 = vmatpush1.bf16.msra.mxu0 %v1049
    %1098 = vmatprep.subr.bf16.mxu0 %v1053
    %1099 = vmatpush1.bf16.msra.mxu0 %v1052
    %1100 = vmatprep.subr.bf16.mxu0 %v1056
    %1101 = vmatpush1.bf16.msra.mxu0 %v1055
    %1102 = vmatprep.subr.bf16.mxu0 %v1059
    %1103 = vmatpush1.bf16.msra.mxu0 %v1058
    %1104 = vmatprep.subr.bf16.mxu0 %v1062
    %1105 = vmatpush1.bf16.msra.mxu0 %v1061
    %1106 = vmatprep.subr.bf16.mxu0 %v1065
    %1107 = vmatpush1.bf16.msra.mxu0 %v1064
    %1108 = vmatprep.subr.bf16.mxu0 %v1068
    %1109 = vmatpush1.bf16.msra.mxu0 %v1067
    %1110 = vmatprep.subr.bf16.mxu0 %v1071
    %1111 = vmatpush1.bf16.msra.mxu0 %v1070
    %1112 = vmatprep.subr.bf16.mxu0 %v1074
    %1113 = vmatpush1.bf16.msra.mxu0 %v1073
    %1114 = vmatprep.subr.bf16.mxu0 %v1077
    %1115 = vmatpush1.bf16.msra.mxu0 %v1076
    %1116 = vmatprep.subr.bf16.mxu0 %v1080
    %1117 = vmatpush1.bf16.msra.mxu0 %v1079
    %1118 = vmatprep.subr.bf16.mxu0 %v1083
    %1119 = vmatpush1.bf16.msra.mxu0 %v1082
    %1120 = vmatprep.subr.bf16.mxu0 %v1086
    %1121 = vmatpush1.bf16.msra.mxu0 %v1085
    %1122 = vmatprep.mubr.bf16.mxu0 %v1089
    %1123 = vmatmul.mubr.bf16.gmra.mrb[0].mxu0 %v1088
    %v1124 = vpop.f32.mrb[0].mxu0
    %v1125 = vadd.f32 0.0, %v1124
    %v1126 = vpop.f32.mrb[0].mxu0
    %v1127 = vadd.f32 0.0, %v1126
    %v1128 = vpop.f32.mrb[0].mxu0
    %v1129 = vpop.f32.mrb[0].mxu0
    %1130 = vdwg.mxu0
    %1131 = vmatprep.subr.bf16.mxu0 0
    %1132 = vmatpush1.bf16.msra.mxu0 %v1042
    %1133 = vmatprep.subr.bf16.mxu0 0
    %1134 = vmatpush1.bf16.msra.mxu0 %v1045
    %1135 = vmatprep.subr.bf16.mxu0 0
    %1136 = vmatpush1.bf16.msra.mxu0 %v1048
    %1137 = vmatprep.subr.bf16.mxu0 0
    %1138 = vmatpush1.bf16.msra.mxu0 %v1051
    %1139 = vmatprep.subr.bf16.mxu0 0
    %1140 = vmatpush1.bf16.msra.mxu0 %v1054
    %1141 = vmatprep.subr.bf16.mxu0 0
    %1142 = vmatpush1.bf16.msra.mxu0 %v1057
    %1143 = vmatprep.subr.bf16.mxu0 0
    %1144 = vmatpush1.bf16.msra.mxu0 %v1060
    %1145 = vmatprep.subr.bf16.mxu0 0
    %1146 = vmatpush1.bf16.msra.mxu0 %v1063
    %1147 = vmatprep.subr.bf16.mxu0 0
    %1148 = vmatpush1.bf16.msra.mxu0 %v1066
    %1149 = vmatprep.subr.bf16.mxu0 0
    %1150 = vmatpush1.bf16.msra.mxu0 %v1069
    %1151 = vmatprep.subr.bf16.mxu0 0
    %1152 = vmatpush1.bf16.msra.mxu0 %v1072
    %1153 = vmatprep.subr.bf16.mxu0 0
    %1154 = vmatpush1.bf16.msra.mxu0 %v1075
    %1155 = vmatprep.subr.bf16.mxu0 0
    %1156 = vmatpush1.bf16.msra.mxu0 %v1078
    %1157 = vmatprep.subr.bf16.mxu0 0
    %1158 = vmatpush1.bf16.msra.mxu0 %v1081
    %1159 = vmatprep.subr.bf16.mxu0 0
    %1160 = vmatpush1.bf16.msra.mxu0 %v1084
    %1161 = vmatprep.subr.bf16.mxu0 0
    %1162 = vmatpush1.bf16.msra.mxu0 %v1087
    %1163 = vmatprep.mubr.bf16.mxu0 %v1089
    %1164 = vmatmul.mubr.bf16.gmra.mrb[0].mxu0 %v1088
    %v1165 = vpop.f32.mrb[0].mxu0
    %v1166 = vadd.f32 0.0, %v1165
    %v1167 = vpop.f32.mrb[0].mxu0
    %v1168 = vpop.f32.mrb[0].mxu0
    %v1169 = vpop.f32.mrb[0].mxu0
    %1170 = vdwg.mxu0
    %v1171 = vadd.f32 %v881, %v1125
    %v1172 = vadd.f32 %v883, %v1127
    %s1173 = scalar_lea.vmem %s4, 2
    %v1174 = vld [vmem:[%s1173] ss:$8 sm:$0x3]
    %v1176 = vlaneseq
    %v1177 = vshrl.u32 %v1176, 7
    %v1178 = vsub.s32 0, %v1177
    %v1179 = vrot.slane %v1174, %v1178
    %v1180 = vlaneseq
    %v1181 = vshrl.u32 %v1180, 7
    %v1182 = vsub.s32 1, %v1181
    %v1183 = vrot.slane %v1174, %v1182
    %v1186 = vadd.f32 %v1171, %v1179
    %v1187 = vadd.f32 %v1172, %v1183
    %v1188 = vmax.f32 %v1186, 0.0
    %v1189 = vmax.f32 %v1187, 0.0
    %s1190 = sshll.u32 %s944, 4
    %1191 = dma.done %s110, %s1190
    %v1192 = vld [vmem:[#allocation4] sm:$0xff]
    %v1193 = vld [vmem:[#allocation4 + $0x8] sm:$0xff]
    %v1194 = vld [vmem:[#allocation4 + $0x10] sm:$0xff]
    %v1195 = vld [vmem:[#allocation4 + $0x18] sm:$0xff]
    %v1196 = vld [vmem:[#allocation4 + $0x20] sm:$0xff]
    %v1197 = vld [vmem:[#allocation4 + $0x28] sm:$0xff]
    %v1198 = vld [vmem:[#allocation4 + $0x30] sm:$0xff]
    %v1199 = vld [vmem:[#allocation4 + $0x38] sm:$0xff]
    %v1200 = vld [vmem:[#allocation4 + $0x40] sm:$0xff]
    %v1201 = vld [vmem:[#allocation4 + $0x48] sm:$0xff]
    %v1202 = vld [vmem:[#allocation4 + $0x50] sm:$0xff]
    %v1203 = vld [vmem:[#allocation4 + $0x58] sm:$0xff]
    %v1204 = vld [vmem:[#allocation4 + $0x60] sm:$0xff]
    %v1205 = vld [vmem:[#allocation4 + $0x68] sm:$0xff]
    %v1206 = vld [vmem:[#allocation4 + $0x70] sm:$0xff]
    %v1207 = vld [vmem:[#allocation4 + $0x78] sm:$0xff]
    %v1208 = vld [vmem:[#allocation4 + $0x80] sm:$0xff]
    %v1209 = vld [vmem:[#allocation4 + $0x88] sm:$0xff]
    %v1210 = vld [vmem:[#allocation4 + $0x90] sm:$0xff]
    %v1211 = vld [vmem:[#allocation4 + $0x98] sm:$0xff]
    %v1212 = vld [vmem:[#allocation4 + $0xa0] sm:$0xff]
    %v1213 = vld [vmem:[#allocation4 + $0xa8] sm:$0xff]
    %v1214 = vld [vmem:[#allocation4 + $0xb0] sm:$0xff]
    %v1215 = vld [vmem:[#allocation4 + $0xb8] sm:$0xff]
    %v1216 = vld [vmem:[#allocation4 + $0xc0] sm:$0xff]
    %v1217 = vld [vmem:[#allocation4 + $0xc8] sm:$0xff]
    %v1218 = vld [vmem:[#allocation4 + $0xd0] sm:$0xff]
    %v1219 = vld [vmem:[#allocation4 + $0xd8] sm:$0xff]
    %v1220 = vld [vmem:[#allocation4 + $0xe0] sm:$0xff]
    %v1221 = vld [vmem:[#allocation4 + $0xe8] sm:$0xff]
    %v1222 = vld [vmem:[#allocation4 + $0xf0] sm:$0xff]
    %v1223 = vld [vmem:[#allocation4 + $0xf8] sm:$0xff]
    %v1224 = vpack.c.bf16 %v1188, %v1188
    %v1225 = vpack.c.bf16 %v1189, %v1189
    %s1226 = scalar_lea.vmem %s4, 3
    %v1227 = vld [vmem:[%s1226] ss:$8 sm:$0x3]
    %v1229 = vlaneseq
    %v1230 = vshrl.u32 %v1229, 7
    %v1231 = vsub.s32 0, %v1230
    %v1232 = vrot.slane %v1227, %v1231
    %v1233 = vlaneseq
    %v1234 = vshrl.u32 %v1233, 7
    %v1235 = vsub.s32 1, %v1234
    %v1236 = vrot.slane %v1227, %v1235
    %1239 = vmatprep.subr.bf16.mxu0 %v1193
    %1240 = vmatpush1.bf16.msra.mxu0 %v1192
    %1241 = vmatprep.subr.bf16.mxu0 %v1195
    %1242 = vmatpush1.bf16.msra.mxu0 %v1194
    %1243 = vmatprep.subr.bf16.mxu0 %v1197
    %1244 = vmatpush1.bf16.msra.mxu0 %v1196
    %1245 = vmatprep.subr.bf16.mxu0 %v1199
    %1246 = vmatpush1.bf16.msra.mxu0 %v1198
    %1247 = vmatprep.subr.bf16.mxu0 %v1201
    %1248 = vmatpush1.bf16.msra.mxu0 %v1200
    %1249 = vmatprep.subr.bf16.mxu0 %v1203
    %1250 = vmatpush1.bf16.msra.mxu0 %v1202
    %1251 = vmatprep.subr.bf16.mxu0 %v1205
    %1252 = vmatpush1.bf16.msra.mxu0 %v1204
    %1253 = vmatprep.subr.bf16.mxu0 %v1207
    %1254 = vmatpush1.bf16.msra.mxu0 %v1206
    %1255 = vmatprep.subr.bf16.mxu0 %v1209
    %1256 = vmatpush1.bf16.msra.mxu0 %v1208
    %1257 = vmatprep.subr.bf16.mxu0 %v1211
    %1258 = vmatpush1.bf16.msra.mxu0 %v1210
    %1259 = vmatprep.subr.bf16.mxu0 %v1213
    %1260 = vmatpush1.bf16.msra.mxu0 %v1212
    %1261 = vmatprep.subr.bf16.mxu0 %v1215
    %1262 = vmatpush1.bf16.msra.mxu0 %v1214
    %1263 = vmatprep.subr.bf16.mxu0 %v1217
    %1264 = vmatpush1.bf16.msra.mxu0 %v1216
    %1265 = vmatprep.subr.bf16.mxu0 %v1219
    %1266 = vmatpush1.bf16.msra.mxu0 %v1218
    %1267 = vmatprep.subr.bf16.mxu0 %v1221
    %1268 = vmatpush1.bf16.msra.mxu0 %v1220
    %1269 = vmatprep.subr.bf16.mxu0 %v1223
    %1270 = vmatpush1.bf16.msra.mxu0 %v1222
    %1271 = vmatprep.mubr.bf16.mxu0 %v1225
    %1272 = vmatmul.mubr.bf16.gmra.mrb[0].mxu0 %v1224
    %v1273 = vpop.f32.mrb[0].mxu0
    %v1274 = vadd.f32 %v1232, %v1273
    %v1275 = vpop.f32.mrb[0].mxu0
    %v1276 = vadd.f32 %v1236, %v1275
    %v1277 = vpop.f32.mrb[0].mxu0
    %v1278 = vpop.f32.mrb[0].mxu0
    %1279 = vdwg.mxu0
    %v1280 = vmax.f32 %v1274, 0.0
    %v1281 = vmax.f32 %v1276, 0.0
    %s1282 = smul.u32 %s943, 1
    %s1283 = sshll.u32 %s1282, 4
    %1284 = dma.done %s145, %s1283
    %v1285 = vadd.f32 %v922, %v1166
    %v1286 = vld [vmem:[#allocation5] sm:$0xff]
    %v1287 = vld [vmem:[#allocation5 + $0x8] sm:$0xff]
    %v1288 = vld [vmem:[#allocation5 + $0x10] sm:$0xff]
    %v1289 = vld [vmem:[#allocation5 + $0x18] sm:$0xff]
    %v1290 = vld [vmem:[#allocation5 + $0x20] sm:$0xff]
    %v1291 = vld [vmem:[#allocation5 + $0x28] sm:$0xff]
    %v1292 = vld [vmem:[#allocation5 + $0x30] sm:$0xff]
    %v1293 = vld [vmem:[#allocation5 + $0x38] sm:$0xff]
    %v1294 = vld [vmem:[#allocation5 + $0x40] sm:$0xff]
    %v1295 = vld [vmem:[#allocation5 + $0x48] sm:$0xff]
    %v1296 = vld [vmem:[#allocation5 + $0x50] sm:$0xff]
    %v1297 = vld [vmem:[#allocation5 + $0x58] sm:$0xff]
    %v1298 = vld [vmem:[#allocation5 + $0x60] sm:$0xff]
    %v1299 = vld [vmem:[#allocation5 + $0x68] sm:$0xff]
    %v1300 = vld [vmem:[#allocation5 + $0x70] sm:$0xff]
    %v1301 = vld [vmem:[#allocation5 + $0x78] sm:$0xff]
    %v1302 = vpack.c.bf16 %v1280, %v1280
    %v1303 = vpack.c.bf16 %v1281, %v1281
    %1304 = vmatprep.subr.bf16.mxu0 0
    %1305 = vmatpush1.bf16.msra.mxu0 %v1286
    %1306 = vmatprep.subr.bf16.mxu0 0
    %1307 = vmatpush1.bf16.msra.mxu0 %v1287
    %1308 = vmatprep.subr.bf16.mxu0 0
    %1309 = vmatpush1.bf16.msra.mxu0 %v1288
    %1310 = vmatprep.subr.bf16.mxu0 0
    %1311 = vmatpush1.bf16.msra.mxu0 %v1289
    %1312 = vmatprep.subr.bf16.mxu0 0
    %1313 = vmatpush1.bf16.msra.mxu0 %v1290
    %1314 = vmatprep.subr.bf16.mxu0 0
    %1315 = vmatpush1.bf16.msra.mxu0 %v1291
    %1316 = vmatprep.subr.bf16.mxu0 0
    %1317 = vmatpush1.bf16.msra.mxu0 %v1292
    %1318 = vmatprep.subr.bf16.mxu0 0
    %1319 = vmatpush1.bf16.msra.mxu0 %v1293
    %1320 = vmatprep.subr.bf16.mxu0 0
    %1321 = vmatpush1.bf16.msra.mxu0 %v1294
    %1322 = vmatprep.subr.bf16.mxu0 0
    %1323 = vmatpush1.bf16.msra.mxu0 %v1295
    %1324 = vmatprep.subr.bf16.mxu0 0
    %1325 = vmatpush1.bf16.msra.mxu0 %v1296
    %1326 = vmatprep.subr.bf16.mxu0 0
    %1327 = vmatpush1.bf16.msra.mxu0 %v1297
    %1328 = vmatprep.subr.bf16.mxu0 0
    %1329 = vmatpush1.bf16.msra.mxu0 %v1298
    %1330 = vmatprep.subr.bf16.mxu0 0
    %1331 = vmatpush1.bf16.msra.mxu0 %v1299
    %1332 = vmatprep.subr.bf16.mxu0 0
    %1333 = vmatpush1.bf16.msra.mxu0 %v1300
    %1334 = vmatprep.subr.bf16.mxu0 0
    %1335 = vmatpush1.bf16.msra.mxu0 %v1301
    %1336 = vmatprep.mubr.bf16.mxu0 %v1303
    %1337 = vmatmul.mubr.bf16.gmra.mrb[0].mxu0 %v1302
    %v1338 = vpop.f32.mrb[0].mxu0
    %v1339 = vadd.f32 0.0, %v1338
    %v1340 = vpop.f32.mrb[0].mxu0
    %v1341 = vpop.f32.mrb[0].mxu0
    %v1342 = vpop.f32.mrb[0].mxu0
    %1343 = vdwg.mxu0
    %v1344 = vadd.f32 %v1285, %v1339
    %v1345 = vld [vmem:[%s4 + $0x4] ss:$0 sm:$0xff]
    %v1346 = vadd.f32 %v1344, %v1345
    %v1347 = vmax.f32 %v1346, 0.0
    %v1348 = vld [vmem:[%s4 + $0x5] ss:$0 sm:$0xff]
    %v1349 = vmul.f32 %v1347, %v1348
    %v1350 = vld [vmem:[%s4 + $0x6] ss:$0 sm:$0xff]
    %v1351 = vadd.f32 %v1349, %v1350
    %1352 = vst [vmem:[#allocation10] sm:$0x3] %v1351
    // Predicated region
    $region60: #{tpu_custom_call.1} parent=1 // pred_check
      _
    $region61: #{tpu_custom_call.1} parent=1 // pred_check_branch
      %1354 = sbr.rel (0) target = $region63
    $region62: #{tpu_custom_call.1} parent=1 // pred_region
      %s1356 = ssub.s32 32, 32
      %1357 = vsyncadd [#allocation9], %s1356
      %s1359 = sshll.u32 [#allocation10], 4
      %s1360 = int_to_ptr.vmem [resolvable:$true] %s1359
      %1362 = dma.vmem_to_hbm [thread:$0]  %s1360, 32, %s9, [#allocation9]
    $region63: #{tpu_custom_call.1} parent=1 // pred_fallthru
      _
    // Predicated region
    $region64: #{tpu_custom_call.1} parent=1 // pred_check
      _
    $region65: #{tpu_custom_call.1} parent=1 // pred_check_branch
      %1364 = sbr.rel (0) target = $region67
    $region66: #{tpu_custom_call.1} parent=1 // pred_region
      %1365 = dma.done [#allocation9], 32
    $region67: #{tpu_custom_call.1} parent=1 // pred_fallthru
      _
    %1366 = vsyncpa [#allocation8], 1
    %1367 = vsyncpa [#allocation9], 1
  %1368 = vsyncmov [#allocation6]
  %s1369 = vpop.sfrf %1368
  %p1370 = scmp.eq.s32.totalorder %s1369, 0
  %p1371 = pneg %p1370
  %1373 = shalt.err (%p1371)
  %s1374 = scalar_lea.sflag [#allocation6], 1
  %1375 = vsyncmov %s1374
  %s1376 = vpop.sfrf %1375
  %p1377 = scmp.eq.s32.totalorder %s1376, 0
  %p1378 = pneg %p1377
  %1380 = shalt.err (%p1378)
  %s1381 = scalar_lea.sflag [#allocation6], 2
  %1382 = vsyncmov %s1381
  %s1383 = vpop.sfrf %1382
  %p1384 = scmp.eq.s32.totalorder %s1383, 0
  %p1385 = pneg %p1384
  %1387 = shalt.err (%p1385)
  %s1388 = scalar_lea.sflag [#allocation6], 3
  %1389 = vsyncmov %s1388
  %s1390 = vpop.sfrf %1389
  %p1391 = scmp.eq.s32.totalorder %s1390, 0
  %p1392 = pneg %p1391
  %1394 = shalt.err (%p1392)

</llo_original>
